<compile_context>
chip_gen: v7x
topology: tpu7x:2x2x1
jax: 0.10.0
libtpu: 0.0.40
codegen_flags: <defaults>
</compile_context>

<pallas_src>
import jax
import jax.numpy as jnp
from jax.experimental import pallas as pl
from jax.experimental.pallas import tpu as pltpu


# --------------------------------------------------------------------------
# Kernels
# --------------------------------------------------------------------------
def _linear_bias_kernel_single(x_ref, w_ref, b_ref, o_ref):
    """Single K-step: whole reduction in one shot, no scratch accumulator.

    x_ref: (B, K)    full flattened input (resident)
    w_ref: (tn, K)   weight tile in PyTorch (N, K) layout
    b_ref: (1, tn)   bias tile (f32)
    o_ref: (B, tn)   output tile
    """
    acc = jnp.dot(x_ref[...], w_ref[...].T, preferred_element_type=jnp.float32)
    o_ref[...] = (acc + b_ref[...].astype(jnp.float32)).astype(o_ref.dtype)


def _linear_bias_kernel_multi(x_ref, w_ref, b_ref, o_ref, acc_ref):
    """Tiled K reduction; grid = (N tiles [parallel], K tiles [arbitrary]).

    x_ref:   (B, tk)   input tile
    w_ref:   (tn, tk)  weight tile in PyTorch (N, K) layout
    b_ref:   (1, tn)   bias tile (f32)
    o_ref:   (B, tn)   output tile (resident across the K axis)
    acc_ref: (B, tn)   f32 accumulator scratch, initialized with the bias
    """
    k = pl.program_id(1)

    @pl.when(k == 0)
    def _init():
        # Fold the bias into the accumulator init (saves an epilogue add).
        acc_ref[...] = jnp.broadcast_to(
            b_ref[...].astype(jnp.float32), acc_ref.shape
        )

    acc_ref[...] += jnp.dot(
        x_ref[...], w_ref[...].T, preferred_element_type=jnp.float32
    )

    @pl.when(k == pl.num_programs(1) - 1)
    def _store():
        o_ref[...] = acc_ref[...].astype(o_ref.dtype)


# --------------------------------------------------------------------------
# Wrapper
# --------------------------------------------------------------------------
def _pick_tile(total, target, align=128):
    """Largest multiple of `align` dividing `total` that is <= target.

    Falls back to `total` itself (full extent, always a legal block) when no
    aligned divisor exists or when total <= target.
    """
    if total <= target:
        return total
    t = (target // align) * align
    while t >= align:
        if total % t == 0:
            return t
        t -= align
    return total


def mlp_upsample(x, weight, bias, output_channels, output_size, *,
                 tn=2048, tk=1024, compute_dtype=None):
    """Pallas implementation of MLPUpSample.forward.

    x:      (B, C, H, W)
    weight: (output_dim, input_dim)  -- PyTorch nn.Linear layout, used as-is
    bias:   (output_dim,)
    compute_dtype: optional streaming dtype (e.g. jnp.bfloat16) for x/weight;
                   accumulation stays f32, output keeps x's original dtype.
    returns (B, output_channels, output_size, output_size)
    """
    B = x.shape[0]
    K = x.shape[1] * x.shape[2] * x.shape[3]          # input_dim
    N = output_channels * output_size * output_size   # output_dim
    assert weight.shape == (N, K), (weight.shape, (N, K))
    assert bias.shape == (N,), bias.shape

    out_dtype = x.dtype
    x_flat = x.reshape(B, K)
    b2 = bias.reshape(1, N).astype(jnp.float32)       # keep bias in f32

    if compute_dtype is not None:
        x_flat = x_flat.astype(compute_dtype)
        weight = weight.astype(compute_dtype)

    tn = _pick_tile(N, tn, 128)
    tk = _pick_tile(K, tk, 128)
    gn, gk = N // tn, K // tk

    # Rough VMEM budget: double-buffered inputs + resident acc/out, with 2x
    # headroom, clamped to [32 MiB, 48 MiB] so it is safe on v7x (64 MiB/TC).
    itemsize = jnp.dtype(x_flat.dtype).itemsize
    need = (2 * (tn * tk + B * tk) * itemsize     # weight + x, double-buffered
            + 2 * 1 * tn * 4                      # bias tiles (f32)
            + 2 * B * tn * itemsize               # output tiles
            + B * tn * 4)                         # f32 accumulator
    vmem_limit = int(min(max(2 * need, 32 * 1024 * 1024), 48 * 1024 * 1024))

    # NOTE: with tiny B only a couple of MXU rows are fed; this kernel is a
    # weight-streaming op and is tuned for HBM bandwidth, not MXU utilization.
    if gk == 1:
        out_flat = pl.pallas_call(
            _linear_bias_kernel_single,
            out_shape=jax.ShapeDtypeStruct((B, N), out_dtype),
            grid_spec=pltpu.PrefetchScalarGridSpec(
                num_scalar_prefetch=0,
                grid=(gn,),
                in_specs=[
                    pl.BlockSpec((B, K), lambda n: (0, 0)),    # x (resident)
                    pl.BlockSpec((tn, K), lambda n: (n, 0)),   # weight (N,K)
                    pl.BlockSpec((1, tn), lambda n: (0, n)),   # bias
                ],
                out_specs=pl.BlockSpec((B, tn), lambda n: (0, n)),
            ),
            compiler_params=pltpu.CompilerParams(
                dimension_semantics=("parallel",),   # N tiles -> v7x megacore
                vmem_limit_bytes=vmem_limit,
            ),
        )(x_flat, weight, b2)
    else:
        out_flat = pl.pallas_call(
            _linear_bias_kernel_multi,
            out_shape=jax.ShapeDtypeStruct((B, N), out_dtype),
            grid_spec=pltpu.PrefetchScalarGridSpec(
                num_scalar_prefetch=0,
                grid=(gn, gk),                       # K reduction last
                in_specs=[
                    pl.BlockSpec((B, tk), lambda n, k: (0, k)),    # x tile
                    pl.BlockSpec((tn, tk), lambda n, k: (n, k)),   # weight tile
                    pl.BlockSpec((1, tn), lambda n, k: (0, n)),    # bias tile
                ],
                out_specs=pl.BlockSpec((B, tn), lambda n, k: (0, n)),
                scratch_shapes=[pltpu.VMEM((B, tn), jnp.float32)],
            ),
            compiler_params=pltpu.CompilerParams(
                dimension_semantics=("parallel", "arbitrary"),
                vmem_limit_bytes=vmem_limit,
            ),
        )(x_flat, weight, b2)

    return out_flat.reshape(B, output_channels, output_size, output_size)


# --------------------------------------------------------------------------
# Self-test
# --------------------------------------------------------------------------
if __name__ == "__main__":
    # CDEIT's Unet config: MLPUpSample(input_channels=1, output_channels=1,
    #                                  input_size=16, output_size=128)
    batch = 2
    input_channels, input_size = 1, 16        # input_dim  = 1*16*16   = 256
    output_channels, output_size = 1, 128     # output_dim = 1*128*128 = 16384
    input_dim = input_channels * input_size * input_size
    output_dim = output_channels * output_size * output_size

    key = jax.random.PRNGKey(0)
    kx, kw, kb = jax.random.split(key, 3)

    cond = jax.random.normal(
        kx, (batch, input_channels, input_size, input_size), dtype=jnp.float32)
    # Deterministic synthetic nn.Linear parameters (PyTorch layout: (out, in))
    bound = 1.0 / (input_dim ** 0.5)
    weight = jax.random.uniform(kw, (output_dim, input_dim),
                                minval=-bound, maxval=bound, dtype=jnp.float32)
    bias = jax.random.uniform(kb, (output_dim,),
                              minval=-bound, maxval=bound, dtype=jnp.float32)

    # Plain-JAX reference
    ref = (cond.reshape(batch, -1) @ weight.T + bias).reshape(
        batch, output_channels, output_size, output_size)

    # f32 path — K=256 fits one tile, exercises the single-step kernel.
    out = mlp_upsample(cond, weight, bias, output_channels, output_size)
    out = jax.block_until_ready(out)
    assert out.shape == (batch, output_channels, output_size, output_size)
    assert jnp.allclose(out, ref, atol=1e-4, rtol=1e-4)

    # Forced K tiling — exercises the accumulating multi-step kernel.
    out_multi = mlp_upsample(cond, weight, bias, output_channels, output_size,
                             tn=1024, tk=128)
    out_multi = jax.block_until_ready(out_multi)
    assert jnp.allclose(out_multi, ref, atol=1e-4, rtol=1e-4)

    # bf16 weight/activation streaming (halves HBM traffic, f32 accumulate).
    out_bf16 = mlp_upsample(cond, weight, bias, output_channels, output_size,
                            compute_dtype=jnp.bfloat16)
    out_bf16 = jax.block_until_ready(out_bf16)
    assert jnp.allclose(out_bf16, ref, atol=5e-2, rtol=5e-2)

    print("KERNEL_OK")
</pallas_src>

<mosaic_0001>
module attributes {stable_mosaic.version = 11 : i64} {
  func.func @_linear_bias_kernel_single(%arg0: i32, %arg1: memref<2x256xf32, #tpu.memory_space<vmem>>, %arg2: memref<2048x256xf32, #tpu.memory_space<vmem>>, %arg3: memref<1x2048xf32, #tpu.memory_space<vmem>>, %arg4: memref<2x2048xf32, #tpu.memory_space<vmem>>) attributes {dimension_semantics = [#tpu.dimension_semantics<parallel>], iteration_bounds = array<i64: 8>, scalar_prefetch = 0 : i64, scratch_operands = 0 : i64, tpu.core_type = #tpu.core_type<tc>, window_params = [{pipeline_mode = #tpu.pipeline_mode<synchronous>, transform_indices = @transform_0, window_bounds = array<i64: 2, 256>}, {transform_indices = @transform_1, window_bounds = array<i64: 2048, 256>}, {transform_indices = @transform_2, window_bounds = array<i64: 1, 2048>}, {transform_indices = @transform_3, window_bounds = array<i64: 2, 2048>}]} {
    %c0 = arith.constant 0 : index
    %c0_0 = arith.constant 0 : index
    %0 = vector.load %arg1[%c0, %c0_0] : memref<2x256xf32, #tpu.memory_space<vmem>>, vector<2x256xf32>
    %c0_1 = arith.constant 0 : index
    %c0_2 = arith.constant 0 : index
    %1 = vector.load %arg2[%c0_1, %c0_2] : memref<2048x256xf32, #tpu.memory_space<vmem>>, vector<2048x256xf32>
    %2 = tpu.transpose %1, [1, 0] : vector<2048x256xf32> -> vector<256x2048xf32>
    %cst = arith.constant dense<0.000000e+00> : vector<2x2048xf32>
    %3 = tpu.matmul %0, %2, %cst {dimension_numbers = #tpu.dot_dimension_numbers<[1], [0], [0], [1], [0, 0, 1, 1], [], []>} : vector<2x256xf32>, vector<256x2048xf32>, vector<2x2048xf32> -> vector<2x2048xf32>
    %c0_3 = arith.constant 0 : index
    %c0_4 = arith.constant 0 : index
    %4 = vector.load %arg3[%c0_3, %c0_4] : memref<1x2048xf32, #tpu.memory_space<vmem>>, vector<1x2048xf32>
    %5 = vector.broadcast %4 : vector<1x2048xf32> to vector<2x2048xf32>
    %6 = arith.addf %3, %5 : vector<2x2048xf32>
    %c0_5 = arith.constant 0 : index
    %c0_6 = arith.constant 0 : index
    %7 = vector.load %arg4[%c0_5, %c0_6] : memref<2x2048xf32, #tpu.memory_space<vmem>>, vector<2x2048xf32>
    tpu.vector_store %arg4[%c0_5, %c0_6], %6 {strides = array<i32>} : memref<2x2048xf32, #tpu.memory_space<vmem>>, vector<2x2048xf32>,
    return
  }
  func.func @transform_0(%arg0: i32) -> (i32, i32) {
    %c0_i32 = arith.constant 0 : i32
    %c0_i32_0 = arith.constant 0 : i32
    %c0_i32_1 = arith.constant 0 : i32
    return %c0_i32, %c0_i32_0 : i32, i32
  }
  func.func @transform_1(%arg0: i32) -> (i32, i32) {
    %c0_i32 = arith.constant 0 : i32
    %c0_i32_0 = arith.constant 0 : i32
    return %arg0, %c0_i32 : i32, i32
  }
  func.func @transform_2(%arg0: i32) -> (i32, i32) {
    %c0_i32 = arith.constant 0 : i32
    %c0_i32_0 = arith.constant 0 : i32
    return %c0_i32, %arg0 : i32, i32
  }
  func.func @transform_3(%arg0: i32) -> (i32, i32) {
    %c0_i32 = arith.constant 0 : i32
    %c0_i32_0 = arith.constant 0 : i32
    return %c0_i32, %arg0 : i32, i32
  }
}

</mosaic_0001>

<llo_original>
// kernel: tpu_custom_call.1
$region0: #{tpu_custom_call.1}
  #allocation0 [shape = 'u32[]', space=smem, size = 0x4, offset = 0x4, fixed_abs, tag = 'smem constant byte address 0x4 - core index']
  #allocation1 [shape = 'u32[144,128]{1,0:T(1,128)}', space=vmem, size = 0x12000, scoped, tag = 'internal scratch']
  %s0 = inlined_call_operand.hbm [shape: f32[2,256], index: 0, kind: input, shape index: {}]
  %s1 = inlined_call_operand.hbm [shape: f32[16384,256], index: 1, kind: input, shape index: {}]
  %s2 = inlined_call_operand.hbm [shape: f32[1,16384], index: 2, kind: input, shape index: {}]
  %s3 = inlined_call_operand.hbm [shape: f32[2,16384], index: 3, kind: output, shape index: {}]
  %s4 = sld [smem:[#allocation0]]
  $region57: #{tpu_custom_call.1} parent=0
    _
  %s6 = ssub.s32 1, %s4
  %s7 = scalar_select 0, %s6, %s4
  $region1: #{tpu_custom_call.1} parent=0
    #allocation2 [shape = 'u8[2048]{0}', space=vmem, size = 0x800, scoped, tag = 'input window, operand 0, single buffered']
    #allocation3 [shape = 's32[2]{0}', space=sflag, size = 0x8, scoped, tag = 'scoped memory for tpu_custom_call.1']
    #allocation4 [shape = 's32[2]{0}', space=sflag, size = 0x8, scoped, tag = 'scoped memory for tpu_custom_call.1']
    #allocation5 [shape = 'u8[4194304]{0}', space=vmem, size = 0x400000, scoped, tag = 'input window, operand 1']
    #allocation6 [shape = 's32[2]{0}', space=sflag, size = 0x8, scoped, tag = 'scoped memory for tpu_custom_call.1']
    #allocation7 [shape = 'u8[16384]{0}', space=vmem, size = 0x4000, scoped, tag = 'input window, operand 2']
    #allocation8 [shape = 'u8[32768]{0}', space=vmem, size = 0x8000, scoped, tag = 'output window, operand 0']
    %8 = vsyncpa [#allocation3], 0
    %9 = vsyncpa [#allocation6], 0
    %s10 = scalar_lea.sflag [#allocation6], 1
    %11 = vsyncpa %s10, 0
    %12 = vsyncpa [#allocation4], 0
    %s13 = scalar_lea.sflag [#allocation4], 1
    %14 = vsyncpa %s13, 0
    loop: start=0, step=1, limit=10
    $region2: #{tpu_custom_call.1} parent=1 // loop_pre_header
      _
    $region3: #{tpu_custom_call.1} parent=1 // loop_header
      %s16 = sphi 0, %s20
      %p17 = scmp.ge.s32.totalorder %s16, 10
      %s24 = sphi 0, %s24
      %s26 = sphi 0, %s24
      %s27 = sphi 0, %s26
      %s41 = sphi 0, %s27
      %s47 = sphi 0, %s49
      %s50 = sphi 0, %s47
      %s51 = sphi 0, %s50
      %s67 = sphi 0, %s51
      %s73 = sphi 0, %s75
      %s76 = sphi 0, %s73
      %s77 = sphi 0, %s76
      %s93 = sphi 0, %s77
      %s99 = sphi 0, %s101
      %s102 = sphi 0, %s99
      %s103 = sphi 0, %s102
      %s119 = sphi 0, %s103
    $region4: #{tpu_custom_call.1} parent=1 // loop_header_branch
      %19 = sbr.rel (%p17) target = $region8
    $region5: #{tpu_custom_call.1} parent=1 // loop_body
      %s21 = ssub.s32 %s16, 1
      %s22 = ssub.s32 %s16, 2
      %s23 = sadd.s32 %s16, 1
      %s25 = sadd.s32 %s24, 1
      %p28 = scmp.eq.s32.totalorder %s16, 7
      %p29 = scmp.ne.s32.totalorder %s24, %s26
      %p30 = scmp.eq.s32.totalorder %s16, 0
      %p31 = por %p29, %p30
      %p32 = scmp.ne.s32.totalorder %s24, %s26
      %p33 = scmp.eq.s32.totalorder %s21, 7
      %p34 = por %p32, %p33
      %p35 = scmp.ne.s32.totalorder %s26, %s27
      %p36 = scmp.eq.s32.totalorder %s21, 0
      %p37 = por %p35, %p36
      %p38 = scmp.ne.s32.totalorder %s26, %s27
      %p39 = scmp.eq.s32.totalorder %s22, 7
      %p40 = por %p38, %p39
      %p42 = scmp.ne.s32.totalorder %s27, %s41
      %p43 = scmp.eq.s32.totalorder %s22, 0
      %p44 = por %p42, %p43
      %s45 = ssub.s32 %s16, %s23
      %p46 = scmp.eq.s32.totalorder %s45, 0
      %s48 = sadd.s32 %s47, 1
      %s49 = scalar_select %p46, %s47, %s48
      %p52 = pneg %p46
      %p53 = scmp.eq.s32.totalorder %s16, 7
      %p54 = por %p52, %p53
      %p55 = scmp.ne.s32.totalorder %s47, %s50
      %p56 = scmp.eq.s32.totalorder %s16, 0
      %p57 = por %p55, %p56
      %p58 = scmp.ne.s32.totalorder %s47, %s50
      %p59 = scmp.eq.s32.totalorder %s21, 7
      %p60 = por %p58, %p59
      %p61 = scmp.ne.s32.totalorder %s50, %s51
      %p62 = scmp.eq.s32.totalorder %s21, 0
      %p63 = por %p61, %p62
      %p64 = scmp.ne.s32.totalorder %s50, %s51
      %p65 = scmp.eq.s32.totalorder %s22, 7
      %p66 = por %p64, %p65
      %p68 = scmp.ne.s32.totalorder %s51, %s67
      %p69 = scmp.eq.s32.totalorder %s22, 0
      %p70 = por %p68, %p69
      %s71 = ssub.s32 %s16, %s23
      %p72 = scmp.eq.s32.totalorder %s71, 0
      %s74 = sadd.s32 %s73, 1
      %s75 = scalar_select %p72, %s73, %s74
      %p78 = pneg %p72
      %p79 = scmp.eq.s32.totalorder %s16, 7
      %p80 = por %p78, %p79
      %p81 = scmp.ne.s32.totalorder %s73, %s76
      %p82 = scmp.eq.s32.totalorder %s16, 0
      %p83 = por %p81, %p82
      %p84 = scmp.ne.s32.totalorder %s73, %s76
      %p85 = scmp.eq.s32.totalorder %s21, 7
      %p86 = por %p84, %p85
      %p87 = scmp.ne.s32.totalorder %s76, %s77
      %p88 = scmp.eq.s32.totalorder %s21, 0
      %p89 = por %p87, %p88
      %p90 = scmp.ne.s32.totalorder %s76, %s77
      %p91 = scmp.eq.s32.totalorder %s22, 7
      %p92 = por %p90, %p91
      %p94 = scmp.ne.s32.totalorder %s77, %s93
      %p95 = scmp.eq.s32.totalorder %s22, 0
      %p96 = por %p94, %p95
      %s97 = ssub.s32 %s16, %s23
      %p98 = scmp.eq.s32.totalorder %s97, 0
      %s100 = sadd.s32 %s99, 1
      %s101 = scalar_select %p98, %s99, %s100
      %p104 = pneg %p98
      %p105 = scmp.eq.s32.totalorder %s16, 7
      %p106 = por %p104, %p105
      %p107 = scmp.ne.s32.totalorder %s99, %s102
      %p108 = scmp.eq.s32.totalorder %s16, 0
      %p109 = por %p107, %p108
      %p110 = scmp.ne.s32.totalorder %s99, %s102
      %p111 = scmp.eq.s32.totalorder %s21, 7
      %p112 = por %p110, %p111
      %p113 = scmp.ne.s32.totalorder %s102, %s103
      %p114 = scmp.eq.s32.totalorder %s21, 0
      %p115 = por %p113, %p114
      %p116 = scmp.ne.s32.totalorder %s102, %s103
      %p117 = scmp.eq.s32.totalorder %s22, 7
      %p118 = por %p116, %p117
      %p120 = scmp.ne.s32.totalorder %s103, %s119
      %p121 = scmp.eq.s32.totalorder %s22, 0
      %p122 = por %p120, %p121
      %p123 = scmp.le.s32.totalorder 1, %s16
      %p124 = scmp.lt.s32.totalorder %s16, 9
      %p125 = pnand %p123, %p124
      %p126 = pneg %p125
      // Predicated region
      $region9: #{tpu_custom_call.1} parent=5 // pred_check
        _
      $region10: #{tpu_custom_call.1} parent=5 // pred_check_branch
        %128 = sbr.rel (%p125) target = $region12
      $region11: #{tpu_custom_call.1} parent=5 // pred_region
        %s129 = ssub.s32 %s16, 1
        // Predicated region
        $region13: #{tpu_custom_call.1} parent=11 // pred_check
          %p130 = pneg %p37
        $region14: #{tpu_custom_call.1} parent=11 // pred_check_branch
          %132 = sbr.rel (%p130) target = $region16
        $region15: #{tpu_custom_call.1} parent=11 // pred_region
          %s134 = ssub.s32 64, 64
          %135 = vsyncadd [#allocation3], %s134
          %s137 = sshll.u32 [#allocation2], 4
          %s138 = int_to_ptr.vmem [resolvable:$true] %s137
          %140 = dma.hbm_to_vmem [thread:$0]  %s0, 64, %s138, [#allocation3]
        $region16: #{tpu_custom_call.1} parent=11 // pred_fallthru
          _
      $region12: #{tpu_custom_call.1} parent=5 // pred_fallthru
        _
      %p141 = scmp.lt.s32.totalorder %s16, 8
      // Predicated region
      $region17: #{tpu_custom_call.1} parent=5 // pred_check
        %p142 = pneg %p141
      $region18: #{tpu_custom_call.1} parent=5 // pred_check_branch
        %144 = sbr.rel (%p142) target = $region20
      $region19: #{tpu_custom_call.1} parent=5 // pred_region
        // Predicated region
        $region21: #{tpu_custom_call.1} parent=19 // pred_check
          %p145 = pneg %p57
        $region22: #{tpu_custom_call.1} parent=19 // pred_check_branch
          %147 = sbr.rel (%p145) target = $region24
        $region23: #{tpu_custom_call.1} parent=19 // pred_region
          %s148 = sand.u32 %s16, 1
          %s149 = scalar_lea.sflag [#allocation6], %s148
          %s150 = sand.u32 %s47, 1
          %s151 = smul.addr %s150, 4096
          %s152 = scalar_lea.vmem [#allocation5], %s151
          %s153 = smul.u32 256, %s16
          %s155 = ssub.s32 65536, 65536
          %156 = vsyncadd %s149, %s155
          %s157 = smul.addr %s153, 2
          %s158 = smul.addr %s157, 128
          %s159 = scalar_lea.hbm %s1, %s158
          %s160 = sshll.u32 %s152, 4
          %s161 = int_to_ptr.vmem [resolvable:$true] %s160
          %166 = dma.hbm_to_vmem [thread:$0]  %s159, 65536, %s161, %s149, 256, 256, 16
        $region24: #{tpu_custom_call.1} parent=19 // pred_fallthru
          _
        // Predicated region
        $region25: #{tpu_custom_call.1} parent=19 // pred_check
          %p167 = pneg %p83
        $region26: #{tpu_custom_call.1} parent=19 // pred_check_branch
          %169 = sbr.rel (%p167) target = $region28
        $region27: #{tpu_custom_call.1} parent=19 // pred_region
          %s170 = sand.u32 %s16, 1
          %s171 = scalar_lea.sflag [#allocation6], %s170
          %s172 = sand.u32 %s73, 1
          %s173 = smul.addr %s172, 16
          %s174 = scalar_lea.vmem [#allocation7], %s173
          %s175 = smul.u32 16, %s16
          %s177 = ssub.s32 256, 256
          %178 = vsyncadd %s171, %s177
          %s179 = smul.addr %s175, 16
          %s180 = scalar_lea.hbm %s2, %s179
          %s182 = sshll.u32 %s174, 4
          %s183 = int_to_ptr.vmem [resolvable:$true] %s182
          %185 = dma.hbm_to_vmem [thread:$0]  %s180, 256, %s183, %s171
        $region28: #{tpu_custom_call.1} parent=19 // pred_fallthru
          _
      $region20: #{tpu_custom_call.1} parent=5 // pred_fallthru
        _
      %p186 = scmp.le.s32.totalorder 1, %s16
      %p187 = scmp.lt.s32.totalorder %s16, 9
      %p188 = pnand %p186, %p187
      %p189 = pneg %p188
      // Predicated region
      $region29: #{tpu_custom_call.1} parent=5 // pred_check
        _
      $region30: #{tpu_custom_call.1} parent=5 // pred_check_branch
        %191 = sbr.rel (%p188) target = $region32
      $region31: #{tpu_custom_call.1} parent=5 // pred_region
        %s192 = ssub.s32 %s16, 1
        // Predicated region
        $region33: #{tpu_custom_call.1} parent=31 // pred_check
          %p193 = pneg %p37
        $region34: #{tpu_custom_call.1} parent=31 // pred_check_branch
          %195 = sbr.rel (%p193) target = $region36
        $region35: #{tpu_custom_call.1} parent=31 // pred_region
          %196 = dma.done [#allocation3], 64
        $region36: #{tpu_custom_call.1} parent=31 // pred_fallthru
          _
        %s197 = sand.u32 %s21, 1
        %s198 = scalar_lea.sflag [#allocation6], %s197
        %s199 = sand.u32 %s50, 1
        %s200 = smul.addr %s199, 4096
        %s201 = scalar_lea.vmem [#allocation5], %s200
        // Predicated region
        $region37: #{tpu_custom_call.1} parent=31 // pred_check
          %p202 = pneg %p63
        $region38: #{tpu_custom_call.1} parent=31 // pred_check_branch
          %204 = sbr.rel (%p202) target = $region40
        $region39: #{tpu_custom_call.1} parent=31 // pred_region
          %205 = dma.done %s198, 65536
        $region40: #{tpu_custom_call.1} parent=31 // pred_fallthru
          _
        %s206 = sand.u32 %s21, 1
        %s207 = scalar_lea.sflag [#allocation6], %s206
        %s208 = sand.u32 %s76, 1
        %s209 = smul.addr %s208, 16
        %s210 = scalar_lea.vmem [#allocation7], %s209
        // Predicated region
        $region41: #{tpu_custom_call.1} parent=31 // pred_check
          %p211 = pneg %p89
        $region42: #{tpu_custom_call.1} parent=31 // pred_check_branch
          %213 = sbr.rel (%p211) target = $region44
        $region43: #{tpu_custom_call.1} parent=31 // pred_region
          %214 = dma.done %s207, 256
        $region44: #{tpu_custom_call.1} parent=31 // pred_fallthru
          _
        %p215 = pneg %p37
        %p216 = pneg %p34
        %s217 = sand.u32 %s21, 1
        %s218 = scalar_lea.sflag [#allocation6], %s217
        %s219 = sand.u32 %s50, 1
        %s220 = smul.addr %s219, 4096
        %s221 = scalar_lea.vmem [#allocation5], %s220
        %p222 = pneg %p63
        %p223 = pneg %p60
        %s224 = sand.u32 %s21, 1
        %s225 = scalar_lea.sflag [#allocation6], %s224
        %s226 = sand.u32 %s76, 1
        %s227 = smul.addr %s226, 16
        %s228 = scalar_lea.vmem [#allocation7], %s227
        %p229 = pneg %p89
        %p230 = pneg %p86
        %p231 = pneg %p115
        %p232 = pneg %p112
        %s233 = sand.u32 %s102, 1
        %s234 = scalar_lea.sflag [#allocation4], %s233
        %s235 = sand.u32 %s102, 1
        %s236 = smul.addr %s235, 32
        %s237 = scalar_lea.vmem [#allocation8], %s236
        %s238 = smul.u32 256, %s21
        %s239 = smul.u32 16, %s21
        %s240 = smul.u32 16, %s21
        %v241 = vld [vmem:[#allocation2] sm:$0xf]
        %v242 = vld [vmem:[%s201] sm:$0xff]
        %v243 = vld [vmem:[%s201 + $0x8] sm:$0xff]
        %v244 = vld [vmem:[%s201 + $0x10] sm:$0xff]
        %v245 = vld [vmem:[%s201 + $0x18] sm:$0xff]
        %v246 = vld [vmem:[%s201 + $0x20] sm:$0xff]
        %v247 = vld [vmem:[%s201 + $0x28] sm:$0xff]
        %v248 = vld [vmem:[%s201 + $0x30] sm:$0xff]
        %v249 = vld [vmem:[%s201 + $0x38] sm:$0xff]
        %v250 = vld [vmem:[%s201 + $0x40] sm:$0xff]
        %v251 = vld [vmem:[%s201 + $0x48] sm:$0xff]
        %v252 = vld [vmem:[%s201 + $0x50] sm:$0xff]
        %v253 = vld [vmem:[%s201 + $0x58] sm:$0xff]
        %v254 = vld [vmem:[%s201 + $0x60] sm:$0xff]
        %v255 = vld [vmem:[%s201 + $0x68] sm:$0xff]
        %v256 = vld [vmem:[%s201 + $0x70] sm:$0xff]
        %v257 = vld [vmem:[%s201 + $0x78] sm:$0xff]
        %v258 = vld [vmem:[%s201 + $0x80] sm:$0xff]
        %v259 = vld [vmem:[%s201 + $0x88] sm:$0xff]
        %v260 = vld [vmem:[%s201 + $0x90] sm:$0xff]
        %v261 = vld [vmem:[%s201 + $0x98] sm:$0xff]
        %v262 = vld [vmem:[%s201 + $0xa0] sm:$0xff]
        %v263 = vld [vmem:[%s201 + $0xa8] sm:$0xff]
        %v264 = vld [vmem:[%s201 + $0xb0] sm:$0xff]
        %v265 = vld [vmem:[%s201 + $0xb8] sm:$0xff]
        %v266 = vld [vmem:[%s201 + $0xc0] sm:$0xff]
        %v267 = vld [vmem:[%s201 + $0xc8] sm:$0xff]
        %v268 = vld [vmem:[%s201 + $0xd0] sm:$0xff]
        %v269 = vld [vmem:[%s201 + $0xd8] sm:$0xff]
        %v270 = vld [vmem:[%s201 + $0xe0] sm:$0xff]
        %v271 = vld [vmem:[%s201 + $0xe8] sm:$0xff]
        %v272 = vld [vmem:[%s201 + $0xf0] sm:$0xff]
        %v273 = vld [vmem:[%s201 + $0xf8] sm:$0xff]
        %v274 = vld [vmem:[%s201 + $0x100] sm:$0xff]
        %v275 = vld [vmem:[%s201 + $0x108] sm:$0xff]
        %v276 = vld [vmem:[%s201 + $0x110] sm:$0xff]
        %v277 = vld [vmem:[%s201 + $0x118] sm:$0xff]
        %v278 = vld [vmem:[%s201 + $0x120] sm:$0xff]
        %v279 = vld [vmem:[%s201 + $0x128] sm:$0xff]
        %v280 = vld [vmem:[%s201 + $0x130] sm:$0xff]
        %v281 = vld [vmem:[%s201 + $0x138] sm:$0xff]
        %v282 = vld [vmem:[%s201 + $0x140] sm:$0xff]
        %v283 = vld [vmem:[%s201 + $0x148] sm:$0xff]
        %v284 = vld [vmem:[%s201 + $0x150] sm:$0xff]
        %v285 = vld [vmem:[%s201 + $0x158] sm:$0xff]
        %v286 = vld [vmem:[%s201 + $0x160] sm:$0xff]
        %v287 = vld [vmem:[%s201 + $0x168] sm:$0xff]
        %v288 = vld [vmem:[%s201 + $0x170] sm:$0xff]
        %v289 = vld [vmem:[%s201 + $0x178] sm:$0xff]
        %v290 = vld [vmem:[%s201 + $0x180] sm:$0xff]
        %v291 = vld [vmem:[%s201 + $0x188] sm:$0xff]
        %v292 = vld [vmem:[%s201 + $0x190] sm:$0xff]
        %v293 = vld [vmem:[%s201 + $0x198] sm:$0xff]
        %v294 = vld [vmem:[%s201 + $0x1a0] sm:$0xff]
        %v295 = vld [vmem:[%s201 + $0x1a8] sm:$0xff]
        %v296 = vld [vmem:[%s201 + $0x1b0] sm:$0xff]
        %v297 = vld [vmem:[%s201 + $0x1b8] sm:$0xff]
        %v298 = vld [vmem:[%s201 + $0x1c0] sm:$0xff]
        %v299 = vld [vmem:[%s201 + $0x1c8] sm:$0xff]
        %v300 = vld [vmem:[%s201 + $0x1d0] sm:$0xff]
        %v301 = vld [vmem:[%s201 + $0x1d8] sm:$0xff]
        %v302 = vld [vmem:[%s201 + $0x1e0] sm:$0xff]
        %v303 = vld [vmem:[%s201 + $0x1e8] sm:$0xff]
        %v304 = vld [vmem:[%s201 + $0x1f0] sm:$0xff]
        %v305 = vld [vmem:[%s201 + $0x1f8] sm:$0xff]
        %v306 = vld [vmem:[%s201 + $0x200] sm:$0xff]
        %v307 = vld [vmem:[%s201 + $0x208] sm:$0xff]
        %v308 = vld [vmem:[%s201 + $0x210] sm:$0xff]
        %v309 = vld [vmem:[%s201 + $0x218] sm:$0xff]
        %v310 = vld [vmem:[%s201 + $0x220] sm:$0xff]
        %v311 = vld [vmem:[%s201 + $0x228] sm:$0xff]
        %v312 = vld [vmem:[%s201 + $0x230] sm:$0xff]
        %v313 = vld [vmem:[%s201 + $0x238] sm:$0xff]
        %v314 = vld [vmem:[%s201 + $0x240] sm:$0xff]
        %v315 = vld [vmem:[%s201 + $0x248] sm:$0xff]
        %v316 = vld [vmem:[%s201 + $0x250] sm:$0xff]
        %v317 = vld [vmem:[%s201 + $0x258] sm:$0xff]
        %v318 = vld [vmem:[%s201 + $0x260] sm:$0xff]
        %v319 = vld [vmem:[%s201 + $0x268] sm:$0xff]
        %v320 = vld [vmem:[%s201 + $0x270] sm:$0xff]
        %v321 = vld [vmem:[%s201 + $0x278] sm:$0xff]
        %v322 = vld [vmem:[%s201 + $0x280] sm:$0xff]
        %v323 = vld [vmem:[%s201 + $0x288] sm:$0xff]
        %v324 = vld [vmem:[%s201 + $0x290] sm:$0xff]
        %v325 = vld [vmem:[%s201 + $0x298] sm:$0xff]
        %v326 = vld [vmem:[%s201 + $0x2a0] sm:$0xff]
        %v327 = vld [vmem:[%s201 + $0x2a8] sm:$0xff]
        %v328 = vld [vmem:[%s201 + $0x2b0] sm:$0xff]
        %v329 = vld [vmem:[%s201 + $0x2b8] sm:$0xff]
        %v330 = vld [vmem:[%s201 + $0x2c0] sm:$0xff]
        %v331 = vld [vmem:[%s201 + $0x2c8] sm:$0xff]
        %v332 = vld [vmem:[%s201 + $0x2d0] sm:$0xff]
        %v333 = vld [vmem:[%s201 + $0x2d8] sm:$0xff]
        %v334 = vld [vmem:[%s201 + $0x2e0] sm:$0xff]
        %v335 = vld [vmem:[%s201 + $0x2e8] sm:$0xff]
        %v336 = vld [vmem:[%s201 + $0x2f0] sm:$0xff]
        %v337 = vld [vmem:[%s201 + $0x2f8] sm:$0xff]
        %v338 = vld [vmem:[%s201 + $0x300] sm:$0xff]
        %v339 = vld [vmem:[%s201 + $0x308] sm:$0xff]
        %v340 = vld [vmem:[%s201 + $0x310] sm:$0xff]
        %v341 = vld [vmem:[%s201 + $0x318] sm:$0xff]
        %v342 = vld [vmem:[%s201 + $0x320] sm:$0xff]
        %v343 = vld [vmem:[%s201 + $0x328] sm:$0xff]
        %v344 = vld [vmem:[%s201 + $0x330] sm:$0xff]
        %v345 = vld [vmem:[%s201 + $0x338] sm:$0xff]
        %v346 = vld [vmem:[%s201 + $0x340] sm:$0xff]
        %v347 = vld [vmem:[%s201 + $0x348] sm:$0xff]
        %v348 = vld [vmem:[%s201 + $0x350] sm:$0xff]
        %v349 = vld [vmem:[%s201 + $0x358] sm:$0xff]
        %v350 = vld [vmem:[%s201 + $0x360] sm:$0xff]
        %v351 = vld [vmem:[%s201 + $0x368] sm:$0xff]
        %v352 = vld [vmem:[%s201 + $0x370] sm:$0xff]
        %v353 = vld [vmem:[%s201 + $0x378] sm:$0xff]
        %v354 = vld [vmem:[%s201 + $0x380] sm:$0xff]
        %v355 = vld [vmem:[%s201 + $0x388] sm:$0xff]
        %v356 = vld [vmem:[%s201 + $0x390] sm:$0xff]
        %v357 = vld [vmem:[%s201 + $0x398] sm:$0xff]
        %v358 = vld [vmem:[%s201 + $0x3a0] sm:$0xff]
        %v359 = vld [vmem:[%s201 + $0x3a8] sm:$0xff]
        %v360 = vld [vmem:[%s201 + $0x3b0] sm:$0xff]
        %v361 = vld [vmem:[%s201 + $0x3b8] sm:$0xff]
        %v362 = vld [vmem:[%s201 + $0x3c0] sm:$0xff]
        %v363 = vld [vmem:[%s201 + $0x3c8] sm:$0xff]
        %v364 = vld [vmem:[%s201 + $0x3d0] sm:$0xff]
        %v365 = vld [vmem:[%s201 + $0x3d8] sm:$0xff]
        %v366 = vld [vmem:[%s201 + $0x3e0] sm:$0xff]
        %v367 = vld [vmem:[%s201 + $0x3e8] sm:$0xff]
        %v368 = vld [vmem:[%s201 + $0x3f0] sm:$0xff]
        %v369 = vld [vmem:[%s201 + $0x3f8] sm:$0xff]
        %v370 = vld [vmem:[%s201 + $0x400] sm:$0xff]
        %v371 = vld [vmem:[%s201 + $0x408] sm:$0xff]
        %v372 = vld [vmem:[%s201 + $0x410] sm:$0xff]
        %v373 = vld [vmem:[%s201 + $0x418] sm:$0xff]
        %v374 = vld [vmem:[%s201 + $0x420] sm:$0xff]
        %v375 = vld [vmem:[%s201 + $0x428] sm:$0xff]
        %v376 = vld [vmem:[%s201 + $0x430] sm:$0xff]
        %v377 = vld [vmem:[%s201 + $0x438] sm:$0xff]
        %v378 = vld [vmem:[%s201 + $0x440] sm:$0xff]
        %v379 = vld [vmem:[%s201 + $0x448] sm:$0xff]
        %v380 = vld [vmem:[%s201 + $0x450] sm:$0xff]
        %v381 = vld [vmem:[%s201 + $0x458] sm:$0xff]
        %v382 = vld [vmem:[%s201 + $0x460] sm:$0xff]
        %v383 = vld [vmem:[%s201 + $0x468] sm:$0xff]
        %v384 = vld [vmem:[%s201 + $0x470] sm:$0xff]
        %v385 = vld [vmem:[%s201 + $0x478] sm:$0xff]
        %v386 = vld [vmem:[%s201 + $0x480] sm:$0xff]
        %v387 = vld [vmem:[%s201 + $0x488] sm:$0xff]
        %v388 = vld [vmem:[%s201 + $0x490] sm:$0xff]
        %v389 = vld [vmem:[%s201 + $0x498] sm:$0xff]
        %v390 = vld [vmem:[%s201 + $0x4a0] sm:$0xff]
        %v391 = vld [vmem:[%s201 + $0x4a8] sm:$0xff]
        %v392 = vld [vmem:[%s201 + $0x4b0] sm:$0xff]
        %v393 = vld [vmem:[%s201 + $0x4b8] sm:$0xff]
        %v394 = vld [vmem:[%s201 + $0x4c0] sm:$0xff]
        %v395 = vld [vmem:[%s201 + $0x4c8] sm:$0xff]
        %v396 = vld [vmem:[%s201 + $0x4d0] sm:$0xff]
        %v397 = vld [vmem:[%s201 + $0x4d8] sm:$0xff]
        %v398 = vld [vmem:[%s201 + $0x4e0] sm:$0xff]
        %v399 = vld [vmem:[%s201 + $0x4e8] sm:$0xff]
        %v400 = vld [vmem:[%s201 + $0x4f0] sm:$0xff]
        %v401 = vld [vmem:[%s201 + $0x4f8] sm:$0xff]
        %v402 = vld [vmem:[%s201 + $0x500] sm:$0xff]
        %v403 = vld [vmem:[%s201 + $0x508] sm:$0xff]
        %v404 = vld [vmem:[%s201 + $0x510] sm:$0xff]
        %v405 = vld [vmem:[%s201 + $0x518] sm:$0xff]
        %v406 = vld [vmem:[%s201 + $0x520] sm:$0xff]
        %v407 = vld [vmem:[%s201 + $0x528] sm:$0xff]
        %v408 = vld [vmem:[%s201 + $0x530] sm:$0xff]
        %v409 = vld [vmem:[%s201 + $0x538] sm:$0xff]
        %v410 = vld [vmem:[%s201 + $0x540] sm:$0xff]
        %v411 = vld [vmem:[%s201 + $0x548] sm:$0xff]
        %v412 = vld [vmem:[%s201 + $0x550] sm:$0xff]
        %v413 = vld [vmem:[%s201 + $0x558] sm:$0xff]
        %v414 = vld [vmem:[%s201 + $0x560] sm:$0xff]
        %v415 = vld [vmem:[%s201 + $0x568] sm:$0xff]
        %v416 = vld [vmem:[%s201 + $0x570] sm:$0xff]
        %v417 = vld [vmem:[%s201 + $0x578] sm:$0xff]
        %v418 = vld [vmem:[%s201 + $0x580] sm:$0xff]
        %v419 = vld [vmem:[%s201 + $0x588] sm:$0xff]
        %v420 = vld [vmem:[%s201 + $0x590] sm:$0xff]
        %v421 = vld [vmem:[%s201 + $0x598] sm:$0xff]
        %v422 = vld [vmem:[%s201 + $0x5a0] sm:$0xff]
        %v423 = vld [vmem:[%s201 + $0x5a8] sm:$0xff]
        %v424 = vld [vmem:[%s201 + $0x5b0] sm:$0xff]
        %v425 = vld [vmem:[%s201 + $0x5b8] sm:$0xff]
        %v426 = vld [vmem:[%s201 + $0x5c0] sm:$0xff]
        %v427 = vld [vmem:[%s201 + $0x5c8] sm:$0xff]
        %v428 = vld [vmem:[%s201 + $0x5d0] sm:$0xff]
        %v429 = vld [vmem:[%s201 + $0x5d8] sm:$0xff]
        %v430 = vld [vmem:[%s201 + $0x5e0] sm:$0xff]
        %v431 = vld [vmem:[%s201 + $0x5e8] sm:$0xff]
        %v432 = vld [vmem:[%s201 + $0x5f0] sm:$0xff]
        %v433 = vld [vmem:[%s201 + $0x5f8] sm:$0xff]
        %v434 = vld [vmem:[%s201 + $0x600] sm:$0xff]
        %v435 = vld [vmem:[%s201 + $0x608] sm:$0xff]
        %v436 = vld [vmem:[%s201 + $0x610] sm:$0xff]
        %v437 = vld [vmem:[%s201 + $0x618] sm:$0xff]
        %v438 = vld [vmem:[%s201 + $0x620] sm:$0xff]
        %v439 = vld [vmem:[%s201 + $0x628] sm:$0xff]
        %v440 = vld [vmem:[%s201 + $0x630] sm:$0xff]
        %v441 = vld [vmem:[%s201 + $0x638] sm:$0xff]
        %v442 = vld [vmem:[%s201 + $0x640] sm:$0xff]
        %v443 = vld [vmem:[%s201 + $0x648] sm:$0xff]
        %v444 = vld [vmem:[%s201 + $0x650] sm:$0xff]
        %v445 = vld [vmem:[%s201 + $0x658] sm:$0xff]
        %v446 = vld [vmem:[%s201 + $0x660] sm:$0xff]
        %v447 = vld [vmem:[%s201 + $0x668] sm:$0xff]
        %v448 = vld [vmem:[%s201 + $0x670] sm:$0xff]
        %v449 = vld [vmem:[%s201 + $0x678] sm:$0xff]
        %v450 = vld [vmem:[%s201 + $0x680] sm:$0xff]
        %v451 = vld [vmem:[%s201 + $0x688] sm:$0xff]
        %v452 = vld [vmem:[%s201 + $0x690] sm:$0xff]
        %v453 = vld [vmem:[%s201 + $0x698] sm:$0xff]
        %v454 = vld [vmem:[%s201 + $0x6a0] sm:$0xff]
        %v455 = vld [vmem:[%s201 + $0x6a8] sm:$0xff]
        %v456 = vld [vmem:[%s201 + $0x6b0] sm:$0xff]
        %v457 = vld [vmem:[%s201 + $0x6b8] sm:$0xff]
        %v458 = vld [vmem:[%s201 + $0x6c0] sm:$0xff]
        %v459 = vld [vmem:[%s201 + $0x6c8] sm:$0xff]
        %v460 = vld [vmem:[%s201 + $0x6d0] sm:$0xff]
        %v461 = vld [vmem:[%s201 + $0x6d8] sm:$0xff]
        %v462 = vld [vmem:[%s201 + $0x6e0] sm:$0xff]
        %v463 = vld [vmem:[%s201 + $0x6e8] sm:$0xff]
        %v464 = vld [vmem:[%s201 + $0x6f0] sm:$0xff]
        %v465 = vld [vmem:[%s201 + $0x6f8] sm:$0xff]
        %v466 = vld [vmem:[%s201 + $0x700] sm:$0xff]
        %v467 = vld [vmem:[%s201 + $0x708] sm:$0xff]
        %v468 = vld [vmem:[%s201 + $0x710] sm:$0xff]
        %v469 = vld [vmem:[%s201 + $0x718] sm:$0xff]
        %v470 = vld [vmem:[%s201 + $0x720] sm:$0xff]
        %v471 = vld [vmem:[%s201 + $0x728] sm:$0xff]
        %v472 = vld [vmem:[%s201 + $0x730] sm:$0xff]
        %v473 = vld [vmem:[%s201 + $0x738] sm:$0xff]
        %v474 = vld [vmem:[%s201 + $0x740] sm:$0xff]
        %v475 = vld [vmem:[%s201 + $0x748] sm:$0xff]
        %v476 = vld [vmem:[%s201 + $0x750] sm:$0xff]
        %v477 = vld [vmem:[%s201 + $0x758] sm:$0xff]
        %v478 = vld [vmem:[%s201 + $0x760] sm:$0xff]
        %v479 = vld [vmem:[%s201 + $0x768] sm:$0xff]
        %v480 = vld [vmem:[%s201 + $0x770] sm:$0xff]
        %v481 = vld [vmem:[%s201 + $0x778] sm:$0xff]
        %v482 = vld [vmem:[%s201 + $0x780] sm:$0xff]
        %v483 = vld [vmem:[%s201 + $0x788] sm:$0xff]
        %v484 = vld [vmem:[%s201 + $0x790] sm:$0xff]
        %v485 = vld [vmem:[%s201 + $0x798] sm:$0xff]
        %v486 = vld [vmem:[%s201 + $0x7a0] sm:$0xff]
        %v487 = vld [vmem:[%s201 + $0x7a8] sm:$0xff]
        %v488 = vld [vmem:[%s201 + $0x7b0] sm:$0xff]
        %v489 = vld [vmem:[%s201 + $0x7b8] sm:$0xff]
        %v490 = vld [vmem:[%s201 + $0x7c0] sm:$0xff]
        %v491 = vld [vmem:[%s201 + $0x7c8] sm:$0xff]
        %v492 = vld [vmem:[%s201 + $0x7d0] sm:$0xff]
        %v493 = vld [vmem:[%s201 + $0x7d8] sm:$0xff]
        %v494 = vld [vmem:[%s201 + $0x7e0] sm:$0xff]
        %v495 = vld [vmem:[%s201 + $0x7e8] sm:$0xff]
        %v496 = vld [vmem:[%s201 + $0x7f0] sm:$0xff]
        %v497 = vld [vmem:[%s201 + $0x7f8] sm:$0xff]
        %v498 = vld [vmem:[%s201 + $0x800] sm:$0xff]
        %v499 = vld [vmem:[%s201 + $0x808] sm:$0xff]
        %v500 = vld [vmem:[%s201 + $0x810] sm:$0xff]
        %v501 = vld [vmem:[%s201 + $0x818] sm:$0xff]
        %v502 = vld [vmem:[%s201 + $0x820] sm:$0xff]
        %v503 = vld [vmem:[%s201 + $0x828] sm:$0xff]
        %v504 = vld [vmem:[%s201 + $0x830] sm:$0xff]
        %v505 = vld [vmem:[%s201 + $0x838] sm:$0xff]
        %v506 = vld [vmem:[%s201 + $0x840] sm:$0xff]
        %v507 = vld [vmem:[%s201 + $0x848] sm:$0xff]
        %v508 = vld [vmem:[%s201 + $0x850] sm:$0xff]
        %v509 = vld [vmem:[%s201 + $0x858] sm:$0xff]
        %v510 = vld [vmem:[%s201 + $0x860] sm:$0xff]
        %v511 = vld [vmem:[%s201 + $0x868] sm:$0xff]
        %v512 = vld [vmem:[%s201 + $0x870] sm:$0xff]
        %v513 = vld [vmem:[%s201 + $0x878] sm:$0xff]
        %v514 = vld [vmem:[%s201 + $0x880] sm:$0xff]
        %v515 = vld [vmem:[%s201 + $0x888] sm:$0xff]
        %v516 = vld [vmem:[%s201 + $0x890] sm:$0xff]
        %v517 = vld [vmem:[%s201 + $0x898] sm:$0xff]
        %v518 = vld [vmem:[%s201 + $0x8a0] sm:$0xff]
        %v519 = vld [vmem:[%s201 + $0x8a8] sm:$0xff]
        %v520 = vld [vmem:[%s201 + $0x8b0] sm:$0xff]
        %v521 = vld [vmem:[%s201 + $0x8b8] sm:$0xff]
        %v522 = vld [vmem:[%s201 + $0x8c0] sm:$0xff]
        %v523 = vld [vmem:[%s201 + $0x8c8] sm:$0xff]
        %v524 = vld [vmem:[%s201 + $0x8d0] sm:$0xff]
        %v525 = vld [vmem:[%s201 + $0x8d8] sm:$0xff]
        %v526 = vld [vmem:[%s201 + $0x8e0] sm:$0xff]
        %v527 = vld [vmem:[%s201 + $0x8e8] sm:$0xff]
        %v528 = vld [vmem:[%s201 + $0x8f0] sm:$0xff]
        %v529 = vld [vmem:[%s201 + $0x8f8] sm:$0xff]
        %v530 = vld [vmem:[%s201 + $0x900] sm:$0xff]
        %v531 = vld [vmem:[%s201 + $0x908] sm:$0xff]
        %v532 = vld [vmem:[%s201 + $0x910] sm:$0xff]
        %v533 = vld [vmem:[%s201 + $0x918] sm:$0xff]
        %v534 = vld [vmem:[%s201 + $0x920] sm:$0xff]
        %v535 = vld [vmem:[%s201 + $0x928] sm:$0xff]
        %v536 = vld [vmem:[%s201 + $0x930] sm:$0xff]
        %v537 = vld [vmem:[%s201 + $0x938] sm:$0xff]
        %v538 = vld [vmem:[%s201 + $0x940] sm:$0xff]
        %v539 = vld [vmem:[%s201 + $0x948] sm:$0xff]
        %v540 = vld [vmem:[%s201 + $0x950] sm:$0xff]
        %v541 = vld [vmem:[%s201 + $0x958] sm:$0xff]
        %v542 = vld [vmem:[%s201 + $0x960] sm:$0xff]
        %v543 = vld [vmem:[%s201 + $0x968] sm:$0xff]
        %v544 = vld [vmem:[%s201 + $0x970] sm:$0xff]
        %v545 = vld [vmem:[%s201 + $0x978] sm:$0xff]
        %v546 = vld [vmem:[%s201 + $0x980] sm:$0xff]
        %v547 = vld [vmem:[%s201 + $0x988] sm:$0xff]
        %v548 = vld [vmem:[%s201 + $0x990] sm:$0xff]
        %v549 = vld [vmem:[%s201 + $0x998] sm:$0xff]
        %v550 = vld [vmem:[%s201 + $0x9a0] sm:$0xff]
        %v551 = vld [vmem:[%s201 + $0x9a8] sm:$0xff]
        %v552 = vld [vmem:[%s201 + $0x9b0] sm:$0xff]
        %v553 = vld [vmem:[%s201 + $0x9b8] sm:$0xff]
        %v554 = vld [vmem:[%s201 + $0x9c0] sm:$0xff]
        %v555 = vld [vmem:[%s201 + $0x9c8] sm:$0xff]
        %v556 = vld [vmem:[%s201 + $0x9d0] sm:$0xff]
        %v557 = vld [vmem:[%s201 + $0x9d8] sm:$0xff]
        %v558 = vld [vmem:[%s201 + $0x9e0] sm:$0xff]
        %v559 = vld [vmem:[%s201 + $0x9e8] sm:$0xff]
        %v560 = vld [vmem:[%s201 + $0x9f0] sm:$0xff]
        %v561 = vld [vmem:[%s201 + $0x9f8] sm:$0xff]
        %v562 = vld [vmem:[%s201 + $0xa00] sm:$0xff]
        %v563 = vld [vmem:[%s201 + $0xa08] sm:$0xff]
        %v564 = vld [vmem:[%s201 + $0xa10] sm:$0xff]
        %v565 = vld [vmem:[%s201 + $0xa18] sm:$0xff]
        %v566 = vld [vmem:[%s201 + $0xa20] sm:$0xff]
        %v567 = vld [vmem:[%s201 + $0xa28] sm:$0xff]
        %v568 = vld [vmem:[%s201 + $0xa30] sm:$0xff]
        %v569 = vld [vmem:[%s201 + $0xa38] sm:$0xff]
        %v570 = vld [vmem:[%s201 + $0xa40] sm:$0xff]
        %v571 = vld [vmem:[%s201 + $0xa48] sm:$0xff]
        %v572 = vld [vmem:[%s201 + $0xa50] sm:$0xff]
        %v573 = vld [vmem:[%s201 + $0xa58] sm:$0xff]
        %v574 = vld [vmem:[%s201 + $0xa60] sm:$0xff]
        %v575 = vld [vmem:[%s201 + $0xa68] sm:$0xff]
        %v576 = vld [vmem:[%s201 + $0xa70] sm:$0xff]
        %v577 = vld [vmem:[%s201 + $0xa78] sm:$0xff]
        %v578 = vld [vmem:[%s201 + $0xa80] sm:$0xff]
        %v579 = vld [vmem:[%s201 + $0xa88] sm:$0xff]
        %v580 = vld [vmem:[%s201 + $0xa90] sm:$0xff]
        %v581 = vld [vmem:[%s201 + $0xa98] sm:$0xff]
        %v582 = vld [vmem:[%s201 + $0xaa0] sm:$0xff]
        %v583 = vld [vmem:[%s201 + $0xaa8] sm:$0xff]
        %v584 = vld [vmem:[%s201 + $0xab0] sm:$0xff]
        %v585 = vld [vmem:[%s201 + $0xab8] sm:$0xff]
        %v586 = vld [vmem:[%s201 + $0xac0] sm:$0xff]
        %v587 = vld [vmem:[%s201 + $0xac8] sm:$0xff]
        %v588 = vld [vmem:[%s201 + $0xad0] sm:$0xff]
        %v589 = vld [vmem:[%s201 + $0xad8] sm:$0xff]
        %v590 = vld [vmem:[%s201 + $0xae0] sm:$0xff]
        %v591 = vld [vmem:[%s201 + $0xae8] sm:$0xff]
        %v592 = vld [vmem:[%s201 + $0xaf0] sm:$0xff]
        %v593 = vld [vmem:[%s201 + $0xaf8] sm:$0xff]
        %v594 = vld [vmem:[%s201 + $0xb00] sm:$0xff]
        %v595 = vld [vmem:[%s201 + $0xb08] sm:$0xff]
        %v596 = vld [vmem:[%s201 + $0xb10] sm:$0xff]
        %v597 = vld [vmem:[%s201 + $0xb18] sm:$0xff]
        %v598 = vld [vmem:[%s201 + $0xb20] sm:$0xff]
        %v599 = vld [vmem:[%s201 + $0xb28] sm:$0xff]
        %v600 = vld [vmem:[%s201 + $0xb30] sm:$0xff]
        %v601 = vld [vmem:[%s201 + $0xb38] sm:$0xff]
        %v602 = vld [vmem:[%s201 + $0xb40] sm:$0xff]
        %v603 = vld [vmem:[%s201 + $0xb48] sm:$0xff]
        %v604 = vld [vmem:[%s201 + $0xb50] sm:$0xff]
        %v605 = vld [vmem:[%s201 + $0xb58] sm:$0xff]
        %v606 = vld [vmem:[%s201 + $0xb60] sm:$0xff]
        %v607 = vld [vmem:[%s201 + $0xb68] sm:$0xff]
        %v608 = vld [vmem:[%s201 + $0xb70] sm:$0xff]
        %v609 = vld [vmem:[%s201 + $0xb78] sm:$0xff]
        %v610 = vld [vmem:[%s201 + $0xb80] sm:$0xff]
        %v611 = vld [vmem:[%s201 + $0xb88] sm:$0xff]
        %v612 = vld [vmem:[%s201 + $0xb90] sm:$0xff]
        %v613 = vld [vmem:[%s201 + $0xb98] sm:$0xff]
        %v614 = vld [vmem:[%s201 + $0xba0] sm:$0xff]
        %v615 = vld [vmem:[%s201 + $0xba8] sm:$0xff]
        %v616 = vld [vmem:[%s201 + $0xbb0] sm:$0xff]
        %v617 = vld [vmem:[%s201 + $0xbb8] sm:$0xff]
        %v618 = vld [vmem:[%s201 + $0xbc0] sm:$0xff]
        %v619 = vld [vmem:[%s201 + $0xbc8] sm:$0xff]
        %v620 = vld [vmem:[%s201 + $0xbd0] sm:$0xff]
        %v621 = vld [vmem:[%s201 + $0xbd8] sm:$0xff]
        %v622 = vld [vmem:[%s201 + $0xbe0] sm:$0xff]
        %v623 = vld [vmem:[%s201 + $0xbe8] sm:$0xff]
        %v624 = vld [vmem:[%s201 + $0xbf0] sm:$0xff]
        %v625 = vld [vmem:[%s201 + $0xbf8] sm:$0xff]
        %v626 = vld [vmem:[%s201 + $0xc00] sm:$0xff]
        %v627 = vld [vmem:[%s201 + $0xc08] sm:$0xff]
        %v628 = vld [vmem:[%s201 + $0xc10] sm:$0xff]
        %v629 = vld [vmem:[%s201 + $0xc18] sm:$0xff]
        %v630 = vld [vmem:[%s201 + $0xc20] sm:$0xff]
        %v631 = vld [vmem:[%s201 + $0xc28] sm:$0xff]
        %v632 = vld [vmem:[%s201 + $0xc30] sm:$0xff]
        %v633 = vld [vmem:[%s201 + $0xc38] sm:$0xff]
        %v634 = vld [vmem:[%s201 + $0xc40] sm:$0xff]
        %v635 = vld [vmem:[%s201 + $0xc48] sm:$0xff]
        %v636 = vld [vmem:[%s201 + $0xc50] sm:$0xff]
        %v637 = vld [vmem:[%s201 + $0xc58] sm:$0xff]
        %v638 = vld [vmem:[%s201 + $0xc60] sm:$0xff]
        %v639 = vld [vmem:[%s201 + $0xc68] sm:$0xff]
        %v640 = vld [vmem:[%s201 + $0xc70] sm:$0xff]
        %v641 = vld [vmem:[%s201 + $0xc78] sm:$0xff]
        %v642 = vld [vmem:[%s201 + $0xc80] sm:$0xff]
        %v643 = vld [vmem:[%s201 + $0xc88] sm:$0xff]
        %v644 = vld [vmem:[%s201 + $0xc90] sm:$0xff]
        %v645 = vld [vmem:[%s201 + $0xc98] sm:$0xff]
        %v646 = vld [vmem:[%s201 + $0xca0] sm:$0xff]
        %v647 = vld [vmem:[%s201 + $0xca8] sm:$0xff]
        %v648 = vld [vmem:[%s201 + $0xcb0] sm:$0xff]
        %v649 = vld [vmem:[%s201 + $0xcb8] sm:$0xff]
        %v650 = vld [vmem:[%s201 + $0xcc0] sm:$0xff]
        %v651 = vld [vmem:[%s201 + $0xcc8] sm:$0xff]
        %v652 = vld [vmem:[%s201 + $0xcd0] sm:$0xff]
        %v653 = vld [vmem:[%s201 + $0xcd8] sm:$0xff]
        %v654 = vld [vmem:[%s201 + $0xce0] sm:$0xff]
        %v655 = vld [vmem:[%s201 + $0xce8] sm:$0xff]
        %v656 = vld [vmem:[%s201 + $0xcf0] sm:$0xff]
        %v657 = vld [vmem:[%s201 + $0xcf8] sm:$0xff]
        %v658 = vld [vmem:[%s201 + $0xd00] sm:$0xff]
        %v659 = vld [vmem:[%s201 + $0xd08] sm:$0xff]
        %v660 = vld [vmem:[%s201 + $0xd10] sm:$0xff]
        %v661 = vld [vmem:[%s201 + $0xd18] sm:$0xff]
        %v662 = vld [vmem:[%s201 + $0xd20] sm:$0xff]
        %v663 = vld [vmem:[%s201 + $0xd28] sm:$0xff]
        %v664 = vld [vmem:[%s201 + $0xd30] sm:$0xff]
        %v665 = vld [vmem:[%s201 + $0xd38] sm:$0xff]
        %v666 = vld [vmem:[%s201 + $0xd40] sm:$0xff]
        %v667 = vld [vmem:[%s201 + $0xd48] sm:$0xff]
        %v668 = vld [vmem:[%s201 + $0xd50] sm:$0xff]
        %v669 = vld [vmem:[%s201 + $0xd58] sm:$0xff]
        %v670 = vld [vmem:[%s201 + $0xd60] sm:$0xff]
        %v671 = vld [vmem:[%s201 + $0xd68] sm:$0xff]
        %v672 = vld [vmem:[%s201 + $0xd70] sm:$0xff]
        %v673 = vld [vmem:[%s201 + $0xd78] sm:$0xff]
        %v674 = vld [vmem:[%s201 + $0xd80] sm:$0xff]
        %v675 = vld [vmem:[%s201 + $0xd88] sm:$0xff]
        %v676 = vld [vmem:[%s201 + $0xd90] sm:$0xff]
        %v677 = vld [vmem:[%s201 + $0xd98] sm:$0xff]
        %v678 = vld [vmem:[%s201 + $0xda0] sm:$0xff]
        %v679 = vld [vmem:[%s201 + $0xda8] sm:$0xff]
        %v680 = vld [vmem:[%s201 + $0xdb0] sm:$0xff]
        %v681 = vld [vmem:[%s201 + $0xdb8] sm:$0xff]
        %v682 = vld [vmem:[%s201 + $0xdc0] sm:$0xff]
        %v683 = vld [vmem:[%s201 + $0xdc8] sm:$0xff]
        %v684 = vld [vmem:[%s201 + $0xdd0] sm:$0xff]
        %v685 = vld [vmem:[%s201 + $0xdd8] sm:$0xff]
        %v686 = vld [vmem:[%s201 + $0xde0] sm:$0xff]
        %v687 = vld [vmem:[%s201 + $0xde8] sm:$0xff]
        %v688 = vld [vmem:[%s201 + $0xdf0] sm:$0xff]
        %v689 = vld [vmem:[%s201 + $0xdf8] sm:$0xff]
        %v690 = vld [vmem:[%s201 + $0xe00] sm:$0xff]
        %v691 = vld [vmem:[%s201 + $0xe08] sm:$0xff]
        %v692 = vld [vmem:[%s201 + $0xe10] sm:$0xff]
        %v693 = vld [vmem:[%s201 + $0xe18] sm:$0xff]
        %v694 = vld [vmem:[%s201 + $0xe20] sm:$0xff]
        %v695 = vld [vmem:[%s201 + $0xe28] sm:$0xff]
        %v696 = vld [vmem:[%s201 + $0xe30] sm:$0xff]
        %v697 = vld [vmem:[%s201 + $0xe38] sm:$0xff]
        %v698 = vld [vmem:[%s201 + $0xe40] sm:$0xff]
        %v699 = vld [vmem:[%s201 + $0xe48] sm:$0xff]
        %v700 = vld [vmem:[%s201 + $0xe50] sm:$0xff]
        %v701 = vld [vmem:[%s201 + $0xe58] sm:$0xff]
        %v702 = vld [vmem:[%s201 + $0xe60] sm:$0xff]
        %v703 = vld [vmem:[%s201 + $0xe68] sm:$0xff]
        %v704 = vld [vmem:[%s201 + $0xe70] sm:$0xff]
        %v705 = vld [vmem:[%s201 + $0xe78] sm:$0xff]
        %v706 = vld [vmem:[%s201 + $0xe80] sm:$0xff]
        %v707 = vld [vmem:[%s201 + $0xe88] sm:$0xff]
        %v708 = vld [vmem:[%s201 + $0xe90] sm:$0xff]
        %v709 = vld [vmem:[%s201 + $0xe98] sm:$0xff]
        %v710 = vld [vmem:[%s201 + $0xea0] sm:$0xff]
        %v711 = vld [vmem:[%s201 + $0xea8] sm:$0xff]
        %v712 = vld [vmem:[%s201 + $0xeb0] sm:$0xff]
        %v713 = vld [vmem:[%s201 + $0xeb8] sm:$0xff]
        %v714 = vld [vmem:[%s201 + $0xec0] sm:$0xff]
        %v715 = vld [vmem:[%s201 + $0xec8] sm:$0xff]
        %v716 = vld [vmem:[%s201 + $0xed0] sm:$0xff]
        %v717 = vld [vmem:[%s201 + $0xed8] sm:$0xff]
        %v718 = vld [vmem:[%s201 + $0xee0] sm:$0xff]
        %v719 = vld [vmem:[%s201 + $0xee8] sm:$0xff]
        %v720 = vld [vmem:[%s201 + $0xef0] sm:$0xff]
        %v721 = vld [vmem:[%s201 + $0xef8] sm:$0xff]
        %v722 = vld [vmem:[%s201 + $0xf00] sm:$0xff]
        %v723 = vld [vmem:[%s201 + $0xf08] sm:$0xff]
        %v724 = vld [vmem:[%s201 + $0xf10] sm:$0xff]
        %v725 = vld [vmem:[%s201 + $0xf18] sm:$0xff]
        %v726 = vld [vmem:[%s201 + $0xf20] sm:$0xff]
        %v727 = vld [vmem:[%s201 + $0xf28] sm:$0xff]
        %v728 = vld [vmem:[%s201 + $0xf30] sm:$0xff]
        %v729 = vld [vmem:[%s201 + $0xf38] sm:$0xff]
        %v730 = vld [vmem:[%s201 + $0xf40] sm:$0xff]
        %v731 = vld [vmem:[%s201 + $0xf48] sm:$0xff]
        %v732 = vld [vmem:[%s201 + $0xf50] sm:$0xff]
        %v733 = vld [vmem:[%s201 + $0xf58] sm:$0xff]
        %v734 = vld [vmem:[%s201 + $0xf60] sm:$0xff]
        %v735 = vld [vmem:[%s201 + $0xf68] sm:$0xff]
        %v736 = vld [vmem:[%s201 + $0xf70] sm:$0xff]
        %v737 = vld [vmem:[%s201 + $0xf78] sm:$0xff]
        %v738 = vld [vmem:[%s201 + $0xf80] sm:$0xff]
        %v739 = vld [vmem:[%s201 + $0xf88] sm:$0xff]
        %v740 = vld [vmem:[%s201 + $0xf90] sm:$0xff]
        %v741 = vld [vmem:[%s201 + $0xf98] sm:$0xff]
        %v742 = vld [vmem:[%s201 + $0xfa0] sm:$0xff]
        %v743 = vld [vmem:[%s201 + $0xfa8] sm:$0xff]
        %v744 = vld [vmem:[%s201 + $0xfb0] sm:$0xff]
        %v745 = vld [vmem:[%s201 + $0xfb8] sm:$0xff]
        %v746 = vld [vmem:[%s201 + $0xfc0] sm:$0xff]
        %v747 = vld [vmem:[%s201 + $0xfc8] sm:$0xff]
        %v748 = vld [vmem:[%s201 + $0xfd0] sm:$0xff]
        %v749 = vld [vmem:[%s201 + $0xfd8] sm:$0xff]
        %v750 = vld [vmem:[%s201 + $0xfe0] sm:$0xff]
        %v751 = vld [vmem:[%s201 + $0xfe8] sm:$0xff]
        %v752 = vld [vmem:[%s201 + $0xff0] sm:$0xff]
        %v753 = vld [vmem:[%s201 + $0xff8] sm:$0xff]
        %v754 = vld [vmem:[%s210] sm:$0xff]
        %v755 = vld [vmem:[%s210 + $0x8] sm:$0xff]
        %v758 = vlaneseq
        %v759 = vshrl.u32 %v758, 7
        %v760 = vsub.s32 0, %v759
        %v761 = vrot.slane %v754, %v760
        %v762 = vlaneseq
        %v763 = vshrl.u32 %v762, 7
        %v764 = vsub.s32 1, %v763
        %v765 = vrot.slane %v754, %v764
        %v766 = vlaneseq
        %v767 = vshrl.u32 %v766, 7
        %v768 = vsub.s32 2, %v767
        %v769 = vrot.slane %v754, %v768
        %v770 = vlaneseq
        %v771 = vshrl.u32 %v770, 7
        %v772 = vsub.s32 3, %v771
        %v773 = vrot.slane %v754, %v772
        %v774 = vlaneseq
        %v775 = vshrl.u32 %v774, 7
        %v776 = vsub.s32 4, %v775
        %v777 = vrot.slane %v754, %v776
        %v778 = vlaneseq
        %v779 = vshrl.u32 %v778, 7
        %v780 = vsub.s32 5, %v779
        %v781 = vrot.slane %v754, %v780
        %v782 = vlaneseq
        %v783 = vshrl.u32 %v782, 7
        %v784 = vsub.s32 6, %v783
        %v785 = vrot.slane %v754, %v784
        %v786 = vlaneseq
        %v787 = vshrl.u32 %v786, 7
        %v788 = vsub.s32 7, %v787
        %v789 = vrot.slane %v754, %v788
        %v790 = vlaneseq
        %v791 = vshrl.u32 %v790, 7
        %v792 = vsub.s32 0, %v791
        %v793 = vrot.slane %v755, %v792
        %v794 = vlaneseq
        %v795 = vshrl.u32 %v794, 7
        %v796 = vsub.s32 1, %v795
        %v797 = vrot.slane %v755, %v796
        %v798 = vlaneseq
        %v799 = vshrl.u32 %v798, 7
        %v800 = vsub.s32 2, %v799
        %v801 = vrot.slane %v755, %v800
        %v802 = vlaneseq
        %v803 = vshrl.u32 %v802, 7
        %v804 = vsub.s32 3, %v803
        %v805 = vrot.slane %v755, %v804
        %v806 = vlaneseq
        %v807 = vshrl.u32 %v806, 7
        %v808 = vsub.s32 4, %v807
        %v809 = vrot.slane %v755, %v808
        %v810 = vlaneseq
        %v811 = vshrl.u32 %v810, 7
        %v812 = vsub.s32 5, %v811
        %v813 = vrot.slane %v755, %v812
        %v814 = vlaneseq
        %v815 = vshrl.u32 %v814, 7
        %v816 = vsub.s32 6, %v815
        %v817 = vrot.slane %v755, %v816
        %v818 = vlaneseq
        %v819 = vshrl.u32 %v818, 7
        %v820 = vsub.s32 7, %v819
        %v821 = vrot.slane %v755, %v820
        %v840 = vunpack.c.l.s4 1983009808
        %v841 = vunpack.c.0.s8 %v840
        %v842 = vlaneseq
        %v843 = vshrl.u32 %v842, 7
        %v844 = vsub.s32 %v841, %v843
        %v845 = vrot.slane %v241, %v844
        %v846 = vcombine.high %v845, %v845
        %849 = vmatprep.subr.mxu0 %v243
        %850 = vmatpush1.xpose.msra.mxu0 %v242
        %851 = vmatprep.subr.mxu0 %v245
        %852 = vmatpush1.xpose.msra.mxu0 %v244
        %853 = vmatprep.subr.mxu0 %v247
        %854 = vmatpush1.xpose.msra.mxu0 %v246
        %855 = vmatprep.subr.mxu0 %v249
        %856 = vmatpush1.xpose.msra.mxu0 %v248
        %857 = vmatprep.subr.mxu0 %v251
        %858 = vmatpush1.xpose.msra.mxu0 %v250
        %859 = vmatprep.subr.mxu0 %v253
        %860 = vmatpush1.xpose.msra.mxu0 %v252
        %861 = vmatprep.subr.mxu0 %v255
        %862 = vmatpush1.xpose.msra.mxu0 %v254
        %863 = vmatprep.subr.mxu0 %v257
        %864 = vmatpush1.xpose.msra.mxu0 %v256
        %865 = vmatprep.subr.mxu0 %v259
        %866 = vmatpush1.xpose.msra.mxu0 %v258
        %867 = vmatprep.subr.mxu0 %v261
        %868 = vmatpush1.xpose.msra.mxu0 %v260
        %869 = vmatprep.subr.mxu0 %v263
        %870 = vmatpush1.xpose.msra.mxu0 %v262
        %871 = vmatprep.subr.mxu0 %v265
        %872 = vmatpush1.xpose.msra.mxu0 %v264
        %873 = vmatprep.subr.mxu0 %v267
        %874 = vmatpush1.xpose.msra.mxu0 %v266
        %875 = vmatprep.subr.mxu0 %v269
        %876 = vmatpush1.xpose.msra.mxu0 %v268
        %877 = vmatprep.subr.mxu0 %v271
        %878 = vmatpush1.xpose.msra.mxu0 %v270
        %879 = vmatprep.subr.mxu0 %v273
        %880 = vmatpush1.xpose.msra.mxu0 %v272
        %881 = vmatprep.subr.mxu0 %v275
        %882 = vmatpush1.xpose.msra.mxu0 %v274
        %883 = vmatprep.subr.mxu0 %v277
        %884 = vmatpush1.xpose.msra.mxu0 %v276
        %885 = vmatprep.subr.mxu0 %v279
        %886 = vmatpush1.xpose.msra.mxu0 %v278
        %887 = vmatprep.subr.mxu0 %v281
        %888 = vmatpush1.xpose.msra.mxu0 %v280
        %889 = vmatprep.subr.mxu0 %v283
        %890 = vmatpush1.xpose.msra.mxu0 %v282
        %891 = vmatprep.subr.mxu0 %v285
        %892 = vmatpush1.xpose.msra.mxu0 %v284
        %893 = vmatprep.subr.mxu0 %v287
        %894 = vmatpush1.xpose.msra.mxu0 %v286
        %895 = vmatprep.subr.mxu0 %v289
        %896 = vmatpush1.xpose.msra.mxu0 %v288
        %897 = vmatprep.subr.mxu0 %v291
        %898 = vmatpush1.xpose.msra.mxu0 %v290
        %899 = vmatprep.subr.mxu0 %v293
        %900 = vmatpush1.xpose.msra.mxu0 %v292
        %901 = vmatprep.subr.mxu0 %v295
        %902 = vmatpush1.xpose.msra.mxu0 %v294
        %903 = vmatprep.subr.mxu0 %v297
        %904 = vmatpush1.xpose.msra.mxu0 %v296
        %905 = vmatprep.subr.mxu0 %v299
        %906 = vmatpush1.xpose.msra.mxu0 %v298
        %907 = vmatprep.subr.mxu0 %v301
        %908 = vmatpush1.xpose.msra.mxu0 %v300
        %909 = vmatprep.subr.mxu0 %v303
        %910 = vmatpush1.xpose.msra.mxu0 %v302
        %911 = vmatprep.subr.mxu0 %v305
        %912 = vmatpush1.xpose.msra.mxu0 %v304
        %913 = vmatprep.mubr.f32.mxu0 %v846
        %914 = vmatmul.mubr.f32.gmra.mrb[0].mxu0 %v845
        %v915 = vpop.f32.mrb[0].mxu0
        %v916 = vadd.f32 %v761, %v915
        %v917 = vpop.f32.mrb[0].mxu0
        %v918 = vadd.f32 %v765, %v917
        %919 = vdwg.mxu0
        %920 = vmatprep.subr.mxu0 %v307
        %921 = vmatpush1.xpose.msra.mxu0 %v306
        %922 = vmatprep.subr.mxu0 %v309
        %923 = vmatpush1.xpose.msra.mxu0 %v308
        %924 = vmatprep.subr.mxu0 %v311
        %925 = vmatpush1.xpose.msra.mxu0 %v310
        %926 = vmatprep.subr.mxu0 %v313
        %927 = vmatpush1.xpose.msra.mxu0 %v312
        %928 = vmatprep.subr.mxu0 %v315
        %929 = vmatpush1.xpose.msra.mxu0 %v314
        %930 = vmatprep.subr.mxu0 %v317
        %931 = vmatpush1.xpose.msra.mxu0 %v316
        %932 = vmatprep.subr.mxu0 %v319
        %933 = vmatpush1.xpose.msra.mxu0 %v318
        %934 = vmatprep.subr.mxu0 %v321
        %935 = vmatpush1.xpose.msra.mxu0 %v320
        %936 = vmatprep.subr.mxu0 %v323
        %937 = vmatpush1.xpose.msra.mxu0 %v322
        %938 = vmatprep.subr.mxu0 %v325
        %939 = vmatpush1.xpose.msra.mxu0 %v324
        %940 = vmatprep.subr.mxu0 %v327
        %941 = vmatpush1.xpose.msra.mxu0 %v326
        %942 = vmatprep.subr.mxu0 %v329
        %943 = vmatpush1.xpose.msra.mxu0 %v328
        %944 = vmatprep.subr.mxu0 %v331
        %945 = vmatpush1.xpose.msra.mxu0 %v330
        %946 = vmatprep.subr.mxu0 %v333
        %947 = vmatpush1.xpose.msra.mxu0 %v332
        %948 = vmatprep.subr.mxu0 %v335
        %949 = vmatpush1.xpose.msra.mxu0 %v334
        %950 = vmatprep.subr.mxu0 %v337
        %951 = vmatpush1.xpose.msra.mxu0 %v336
        %952 = vmatprep.subr.mxu0 %v339
        %953 = vmatpush1.xpose.msra.mxu0 %v338
        %954 = vmatprep.subr.mxu0 %v341
        %955 = vmatpush1.xpose.msra.mxu0 %v340
        %956 = vmatprep.subr.mxu0 %v343
        %957 = vmatpush1.xpose.msra.mxu0 %v342
        %958 = vmatprep.subr.mxu0 %v345
        %959 = vmatpush1.xpose.msra.mxu0 %v344
        %960 = vmatprep.subr.mxu0 %v347
        %961 = vmatpush1.xpose.msra.mxu0 %v346
        %962 = vmatprep.subr.mxu0 %v349
        %963 = vmatpush1.xpose.msra.mxu0 %v348
        %964 = vmatprep.subr.mxu0 %v351
        %965 = vmatpush1.xpose.msra.mxu0 %v350
        %966 = vmatprep.subr.mxu0 %v353
        %967 = vmatpush1.xpose.msra.mxu0 %v352
        %968 = vmatprep.subr.mxu0 %v355
        %969 = vmatpush1.xpose.msra.mxu0 %v354
        %970 = vmatprep.subr.mxu0 %v357
        %971 = vmatpush1.xpose.msra.mxu0 %v356
        %972 = vmatprep.subr.mxu0 %v359
        %973 = vmatpush1.xpose.msra.mxu0 %v358
        %974 = vmatprep.subr.mxu0 %v361
        %975 = vmatpush1.xpose.msra.mxu0 %v360
        %976 = vmatprep.subr.mxu0 %v363
        %977 = vmatpush1.xpose.msra.mxu0 %v362
        %978 = vmatprep.subr.mxu0 %v365
        %979 = vmatpush1.xpose.msra.mxu0 %v364
        %980 = vmatprep.subr.mxu0 %v367
        %981 = vmatpush1.xpose.msra.mxu0 %v366
        %982 = vmatprep.subr.mxu0 %v369
        %983 = vmatpush1.xpose.msra.mxu0 %v368
        %984 = vmatprep.mubr.f32.mxu0 %v846
        %985 = vmatmul.mubr.f32.gmra.mrb[0].mxu0 %v845
        %v986 = vpop.f32.mrb[0].mxu0
        %v987 = vadd.f32 %v769, %v986
        %v988 = vpop.f32.mrb[0].mxu0
        %v989 = vadd.f32 %v773, %v988
        %990 = vdwg.mxu0
        %991 = vmatprep.subr.mxu0 %v371
        %992 = vmatpush1.xpose.msra.mxu0 %v370
        %993 = vmatprep.subr.mxu0 %v373
        %994 = vmatpush1.xpose.msra.mxu0 %v372
        %995 = vmatprep.subr.mxu0 %v375
        %996 = vmatpush1.xpose.msra.mxu0 %v374
        %997 = vmatprep.subr.mxu0 %v377
        %998 = vmatpush1.xpose.msra.mxu0 %v376
        %999 = vmatprep.subr.mxu0 %v379
        %1000 = vmatpush1.xpose.msra.mxu0 %v378
        %1001 = vmatprep.subr.mxu0 %v381
        %1002 = vmatpush1.xpose.msra.mxu0 %v380
        %1003 = vmatprep.subr.mxu0 %v383
        %1004 = vmatpush1.xpose.msra.mxu0 %v382
        %1005 = vmatprep.subr.mxu0 %v385
        %1006 = vmatpush1.xpose.msra.mxu0 %v384
        %1007 = vmatprep.subr.mxu0 %v387
        %1008 = vmatpush1.xpose.msra.mxu0 %v386
        %1009 = vmatprep.subr.mxu0 %v389
        %1010 = vmatpush1.xpose.msra.mxu0 %v388
        %1011 = vmatprep.subr.mxu0 %v391
        %1012 = vmatpush1.xpose.msra.mxu0 %v390
        %1013 = vmatprep.subr.mxu0 %v393
        %1014 = vmatpush1.xpose.msra.mxu0 %v392
        %1015 = vmatprep.subr.mxu0 %v395
        %1016 = vmatpush1.xpose.msra.mxu0 %v394
        %1017 = vmatprep.subr.mxu0 %v397
        %1018 = vmatpush1.xpose.msra.mxu0 %v396
        %1019 = vmatprep.subr.mxu0 %v399
        %1020 = vmatpush1.xpose.msra.mxu0 %v398
        %1021 = vmatprep.subr.mxu0 %v401
        %1022 = vmatpush1.xpose.msra.mxu0 %v400
        %1023 = vmatprep.subr.mxu0 %v403
        %1024 = vmatpush1.xpose.msra.mxu0 %v402
        %1025 = vmatprep.subr.mxu0 %v405
        %1026 = vmatpush1.xpose.msra.mxu0 %v404
        %1027 = vmatprep.subr.mxu0 %v407
        %1028 = vmatpush1.xpose.msra.mxu0 %v406
        %1029 = vmatprep.subr.mxu0 %v409
        %1030 = vmatpush1.xpose.msra.mxu0 %v408
        %1031 = vmatprep.subr.mxu0 %v411
        %1032 = vmatpush1.xpose.msra.mxu0 %v410
        %1033 = vmatprep.subr.mxu0 %v413
        %1034 = vmatpush1.xpose.msra.mxu0 %v412
        %1035 = vmatprep.subr.mxu0 %v415
        %1036 = vmatpush1.xpose.msra.mxu0 %v414
        %1037 = vmatprep.subr.mxu0 %v417
        %1038 = vmatpush1.xpose.msra.mxu0 %v416
        %1039 = vmatprep.subr.mxu0 %v419
        %1040 = vmatpush1.xpose.msra.mxu0 %v418
        %1041 = vmatprep.subr.mxu0 %v421
        %1042 = vmatpush1.xpose.msra.mxu0 %v420
        %1043 = vmatprep.subr.mxu0 %v423
        %1044 = vmatpush1.xpose.msra.mxu0 %v422
        %1045 = vmatprep.subr.mxu0 %v425
        %1046 = vmatpush1.xpose.msra.mxu0 %v424
        %1047 = vmatprep.subr.mxu0 %v427
        %1048 = vmatpush1.xpose.msra.mxu0 %v426
        %1049 = vmatprep.subr.mxu0 %v429
        %1050 = vmatpush1.xpose.msra.mxu0 %v428
        %1051 = vmatprep.subr.mxu0 %v431
        %1052 = vmatpush1.xpose.msra.mxu0 %v430
        %1053 = vmatprep.subr.mxu0 %v433
        %1054 = vmatpush1.xpose.msra.mxu0 %v432
        %1055 = vmatprep.mubr.f32.mxu0 %v846
        %1056 = vmatmul.mubr.f32.gmra.mrb[0].mxu0 %v845
        %v1057 = vpop.f32.mrb[0].mxu0
        %v1058 = vadd.f32 %v777, %v1057
        %v1059 = vpop.f32.mrb[0].mxu0
        %v1060 = vadd.f32 %v781, %v1059
        %1061 = vdwg.mxu0
        %1062 = vmatprep.subr.mxu0 %v435
        %1063 = vmatpush1.xpose.msra.mxu0 %v434
        %1064 = vmatprep.subr.mxu0 %v437
        %1065 = vmatpush1.xpose.msra.mxu0 %v436
        %1066 = vmatprep.subr.mxu0 %v439
        %1067 = vmatpush1.xpose.msra.mxu0 %v438
        %1068 = vmatprep.subr.mxu0 %v441
        %1069 = vmatpush1.xpose.msra.mxu0 %v440
        %1070 = vmatprep.subr.mxu0 %v443
        %1071 = vmatpush1.xpose.msra.mxu0 %v442
        %1072 = vmatprep.subr.mxu0 %v445
        %1073 = vmatpush1.xpose.msra.mxu0 %v444
        %1074 = vmatprep.subr.mxu0 %v447
        %1075 = vmatpush1.xpose.msra.mxu0 %v446
        %1076 = vmatprep.subr.mxu0 %v449
        %1077 = vmatpush1.xpose.msra.mxu0 %v448
        %1078 = vmatprep.subr.mxu0 %v451
        %1079 = vmatpush1.xpose.msra.mxu0 %v450
        %1080 = vmatprep.subr.mxu0 %v453
        %1081 = vmatpush1.xpose.msra.mxu0 %v452
        %1082 = vmatprep.subr.mxu0 %v455
        %1083 = vmatpush1.xpose.msra.mxu0 %v454
        %1084 = vmatprep.subr.mxu0 %v457
        %1085 = vmatpush1.xpose.msra.mxu0 %v456
        %1086 = vmatprep.subr.mxu0 %v459
        %1087 = vmatpush1.xpose.msra.mxu0 %v458
        %1088 = vmatprep.subr.mxu0 %v461
        %1089 = vmatpush1.xpose.msra.mxu0 %v460
        %1090 = vmatprep.subr.mxu0 %v463
        %1091 = vmatpush1.xpose.msra.mxu0 %v462
        %1092 = vmatprep.subr.mxu0 %v465
        %1093 = vmatpush1.xpose.msra.mxu0 %v464
        %1094 = vmatprep.subr.mxu0 %v467
        %1095 = vmatpush1.xpose.msra.mxu0 %v466
        %1096 = vmatprep.subr.mxu0 %v469
        %1097 = vmatpush1.xpose.msra.mxu0 %v468
        %1098 = vmatprep.subr.mxu0 %v471
        %1099 = vmatpush1.xpose.msra.mxu0 %v470
        %1100 = vmatprep.subr.mxu0 %v473
        %1101 = vmatpush1.xpose.msra.mxu0 %v472
        %1102 = vmatprep.subr.mxu0 %v475
        %1103 = vmatpush1.xpose.msra.mxu0 %v474
        %1104 = vmatprep.subr.mxu0 %v477
        %1105 = vmatpush1.xpose.msra.mxu0 %v476
        %1106 = vmatprep.subr.mxu0 %v479
        %1107 = vmatpush1.xpose.msra.mxu0 %v478
        %1108 = vmatprep.subr.mxu0 %v481
        %1109 = vmatpush1.xpose.msra.mxu0 %v480
        %1110 = vmatprep.subr.mxu0 %v483
        %1111 = vmatpush1.xpose.msra.mxu0 %v482
        %1112 = vmatprep.subr.mxu0 %v485
        %1113 = vmatpush1.xpose.msra.mxu0 %v484
        %1114 = vmatprep.subr.mxu0 %v487
        %1115 = vmatpush1.xpose.msra.mxu0 %v486
        %1116 = vmatprep.subr.mxu0 %v489
        %1117 = vmatpush1.xpose.msra.mxu0 %v488
        %1118 = vmatprep.subr.mxu0 %v491
        %1119 = vmatpush1.xpose.msra.mxu0 %v490
        %1120 = vmatprep.subr.mxu0 %v493
        %1121 = vmatpush1.xpose.msra.mxu0 %v492
        %1122 = vmatprep.subr.mxu0 %v495
        %1123 = vmatpush1.xpose.msra.mxu0 %v494
        %1124 = vmatprep.subr.mxu0 %v497
        %1125 = vmatpush1.xpose.msra.mxu0 %v496
        %1126 = vmatprep.mubr.f32.mxu0 %v846
        %1127 = vmatmul.mubr.f32.gmra.mrb[0].mxu0 %v845
        %v1128 = vpop.f32.mrb[0].mxu0
        %v1129 = vadd.f32 %v785, %v1128
        %v1130 = vpop.f32.mrb[0].mxu0
        %v1131 = vadd.f32 %v789, %v1130
        %1132 = vdwg.mxu0
        %1133 = vmatprep.subr.mxu0 %v499
        %1134 = vmatpush1.xpose.msra.mxu0 %v498
        %1135 = vmatprep.subr.mxu0 %v501
        %1136 = vmatpush1.xpose.msra.mxu0 %v500
        %1137 = vmatprep.subr.mxu0 %v503
        %1138 = vmatpush1.xpose.msra.mxu0 %v502
        %1139 = vmatprep.subr.mxu0 %v505
        %1140 = vmatpush1.xpose.msra.mxu0 %v504
        %1141 = vmatprep.subr.mxu0 %v507
        %1142 = vmatpush1.xpose.msra.mxu0 %v506
        %1143 = vmatprep.subr.mxu0 %v509
        %1144 = vmatpush1.xpose.msra.mxu0 %v508
        %1145 = vmatprep.subr.mxu0 %v511
        %1146 = vmatpush1.xpose.msra.mxu0 %v510
        %1147 = vmatprep.subr.mxu0 %v513
        %1148 = vmatpush1.xpose.msra.mxu0 %v512
        %1149 = vmatprep.subr.mxu0 %v515
        %1150 = vmatpush1.xpose.msra.mxu0 %v514
        %1151 = vmatprep.subr.mxu0 %v517
        %1152 = vmatpush1.xpose.msra.mxu0 %v516
        %1153 = vmatprep.subr.mxu0 %v519
        %1154 = vmatpush1.xpose.msra.mxu0 %v518
        %1155 = vmatprep.subr.mxu0 %v521
        %1156 = vmatpush1.xpose.msra.mxu0 %v520
        %1157 = vmatprep.subr.mxu0 %v523
        %1158 = vmatpush1.xpose.msra.mxu0 %v522
        %1159 = vmatprep.subr.mxu0 %v525
        %1160 = vmatpush1.xpose.msra.mxu0 %v524
        %1161 = vmatprep.subr.mxu0 %v527
        %1162 = vmatpush1.xpose.msra.mxu0 %v526
        %1163 = vmatprep.subr.mxu0 %v529
        %1164 = vmatpush1.xpose.msra.mxu0 %v528
        %1165 = vmatprep.subr.mxu0 %v531
        %1166 = vmatpush1.xpose.msra.mxu0 %v530
        %1167 = vmatprep.subr.mxu0 %v533
        %1168 = vmatpush1.xpose.msra.mxu0 %v532
        %1169 = vmatprep.subr.mxu0 %v535
        %1170 = vmatpush1.xpose.msra.mxu0 %v534
        %1171 = vmatprep.subr.mxu0 %v537
        %1172 = vmatpush1.xpose.msra.mxu0 %v536
        %1173 = vmatprep.subr.mxu0 %v539
        %1174 = vmatpush1.xpose.msra.mxu0 %v538
        %1175 = vmatprep.subr.mxu0 %v541
        %1176 = vmatpush1.xpose.msra.mxu0 %v540
        %1177 = vmatprep.subr.mxu0 %v543
        %1178 = vmatpush1.xpose.msra.mxu0 %v542
        %1179 = vmatprep.subr.mxu0 %v545
        %1180 = vmatpush1.xpose.msra.mxu0 %v544
        %1181 = vmatprep.subr.mxu0 %v547
        %1182 = vmatpush1.xpose.msra.mxu0 %v546
        %1183 = vmatprep.subr.mxu0 %v549
        %1184 = vmatpush1.xpose.msra.mxu0 %v548
        %1185 = vmatprep.subr.mxu0 %v551
        %1186 = vmatpush1.xpose.msra.mxu0 %v550
        %1187 = vmatprep.subr.mxu0 %v553
        %1188 = vmatpush1.xpose.msra.mxu0 %v552
        %1189 = vmatprep.subr.mxu0 %v555
        %1190 = vmatpush1.xpose.msra.mxu0 %v554
        %1191 = vmatprep.subr.mxu0 %v557
        %1192 = vmatpush1.xpose.msra.mxu0 %v556
        %1193 = vmatprep.subr.mxu0 %v559
        %1194 = vmatpush1.xpose.msra.mxu0 %v558
        %1195 = vmatprep.subr.mxu0 %v561
        %1196 = vmatpush1.xpose.msra.mxu0 %v560
        %1197 = vmatprep.mubr.f32.mxu0 %v846
        %1198 = vmatmul.mubr.f32.gmra.mrb[0].mxu0 %v845
        %v1199 = vpop.f32.mrb[0].mxu0
        %v1200 = vadd.f32 %v793, %v1199
        %v1201 = vpop.f32.mrb[0].mxu0
        %v1202 = vadd.f32 %v797, %v1201
        %1203 = vdwg.mxu0
        %1204 = vmatprep.subr.mxu0 %v563
        %1205 = vmatpush1.xpose.msra.mxu0 %v562
        %1206 = vmatprep.subr.mxu0 %v565
        %1207 = vmatpush1.xpose.msra.mxu0 %v564
        %1208 = vmatprep.subr.mxu0 %v567
        %1209 = vmatpush1.xpose.msra.mxu0 %v566
        %1210 = vmatprep.subr.mxu0 %v569
        %1211 = vmatpush1.xpose.msra.mxu0 %v568
        %1212 = vmatprep.subr.mxu0 %v571
        %1213 = vmatpush1.xpose.msra.mxu0 %v570
        %1214 = vmatprep.subr.mxu0 %v573
        %1215 = vmatpush1.xpose.msra.mxu0 %v572
        %1216 = vmatprep.subr.mxu0 %v575
        %1217 = vmatpush1.xpose.msra.mxu0 %v574
        %1218 = vmatprep.subr.mxu0 %v577
        %1219 = vmatpush1.xpose.msra.mxu0 %v576
        %1220 = vmatprep.subr.mxu0 %v579
        %1221 = vmatpush1.xpose.msra.mxu0 %v578
        %1222 = vmatprep.subr.mxu0 %v581
        %1223 = vmatpush1.xpose.msra.mxu0 %v580
        %1224 = vmatprep.subr.mxu0 %v583
        %1225 = vmatpush1.xpose.msra.mxu0 %v582
        %1226 = vmatprep.subr.mxu0 %v585
        %1227 = vmatpush1.xpose.msra.mxu0 %v584
        %1228 = vmatprep.subr.mxu0 %v587
        %1229 = vmatpush1.xpose.msra.mxu0 %v586
        %1230 = vmatprep.subr.mxu0 %v589
        %1231 = vmatpush1.xpose.msra.mxu0 %v588
        %1232 = vmatprep.subr.mxu0 %v591
        %1233 = vmatpush1.xpose.msra.mxu0 %v590
        %1234 = vmatprep.subr.mxu0 %v593
        %1235 = vmatpush1.xpose.msra.mxu0 %v592
        %1236 = vmatprep.subr.mxu0 %v595
        %1237 = vmatpush1.xpose.msra.mxu0 %v594
        %1238 = vmatprep.subr.mxu0 %v597
        %1239 = vmatpush1.xpose.msra.mxu0 %v596
        %1240 = vmatprep.subr.mxu0 %v599
        %1241 = vmatpush1.xpose.msra.mxu0 %v598
        %1242 = vmatprep.subr.mxu0 %v601
        %1243 = vmatpush1.xpose.msra.mxu0 %v600
        %1244 = vmatprep.subr.mxu0 %v603
        %1245 = vmatpush1.xpose.msra.mxu0 %v602
        %1246 = vmatprep.subr.mxu0 %v605
        %1247 = vmatpush1.xpose.msra.mxu0 %v604
        %1248 = vmatprep.subr.mxu0 %v607
        %1249 = vmatpush1.xpose.msra.mxu0 %v606
        %1250 = vmatprep.subr.mxu0 %v609
        %1251 = vmatpush1.xpose.msra.mxu0 %v608
        %1252 = vmatprep.subr.mxu0 %v611
        %1253 = vmatpush1.xpose.msra.mxu0 %v610
        %1254 = vmatprep.subr.mxu0 %v613
        %1255 = vmatpush1.xpose.msra.mxu0 %v612
        %1256 = vmatprep.subr.mxu0 %v615
        %1257 = vmatpush1.xpose.msra.mxu0 %v614
        %1258 = vmatprep.subr.mxu0 %v617
        %1259 = vmatpush1.xpose.msra.mxu0 %v616
        %1260 = vmatprep.subr.mxu0 %v619
        %1261 = vmatpush1.xpose.msra.mxu0 %v618
        %1262 = vmatprep.subr.mxu0 %v621
        %1263 = vmatpush1.xpose.msra.mxu0 %v620
        %1264 = vmatprep.subr.mxu0 %v623
        %1265 = vmatpush1.xpose.msra.mxu0 %v622
        %1266 = vmatprep.subr.mxu0 %v625
        %1267 = vmatpush1.xpose.msra.mxu0 %v624
        %1268 = vmatprep.mubr.f32.mxu0 %v846
        %1269 = vmatmul.mubr.f32.gmra.mrb[0].mxu0 %v845
        %v1270 = vpop.f32.mrb[0].mxu0
        %v1271 = vadd.f32 %v801, %v1270
        %v1272 = vpop.f32.mrb[0].mxu0
        %v1273 = vadd.f32 %v805, %v1272
        %1274 = vdwg.mxu0
        %1275 = vmatprep.subr.mxu0 %v627
        %1276 = vmatpush1.xpose.msra.mxu0 %v626
        %1277 = vmatprep.subr.mxu0 %v629
        %1278 = vmatpush1.xpose.msra.mxu0 %v628
        %1279 = vmatprep.subr.mxu0 %v631
        %1280 = vmatpush1.xpose.msra.mxu0 %v630
        %1281 = vmatprep.subr.mxu0 %v633
        %1282 = vmatpush1.xpose.msra.mxu0 %v632
        %1283 = vmatprep.subr.mxu0 %v635
        %1284 = vmatpush1.xpose.msra.mxu0 %v634
        %1285 = vmatprep.subr.mxu0 %v637
        %1286 = vmatpush1.xpose.msra.mxu0 %v636
        %1287 = vmatprep.subr.mxu0 %v639
        %1288 = vmatpush1.xpose.msra.mxu0 %v638
        %1289 = vmatprep.subr.mxu0 %v641
        %1290 = vmatpush1.xpose.msra.mxu0 %v640
        %1291 = vmatprep.subr.mxu0 %v643
        %1292 = vmatpush1.xpose.msra.mxu0 %v642
        %1293 = vmatprep.subr.mxu0 %v645
        %1294 = vmatpush1.xpose.msra.mxu0 %v644
        %1295 = vmatprep.subr.mxu0 %v647
        %1296 = vmatpush1.xpose.msra.mxu0 %v646
        %1297 = vmatprep.subr.mxu0 %v649
        %1298 = vmatpush1.xpose.msra.mxu0 %v648
        %1299 = vmatprep.subr.mxu0 %v651
        %1300 = vmatpush1.xpose.msra.mxu0 %v650
        %1301 = vmatprep.subr.mxu0 %v653
        %1302 = vmatpush1.xpose.msra.mxu0 %v652
        %1303 = vmatprep.subr.mxu0 %v655
        %1304 = vmatpush1.xpose.msra.mxu0 %v654
        %1305 = vmatprep.subr.mxu0 %v657
        %1306 = vmatpush1.xpose.msra.mxu0 %v656
        %1307 = vmatprep.subr.mxu0 %v659
        %1308 = vmatpush1.xpose.msra.mxu0 %v658
        %1309 = vmatprep.subr.mxu0 %v661
        %1310 = vmatpush1.xpose.msra.mxu0 %v660
        %1311 = vmatprep.subr.mxu0 %v663
        %1312 = vmatpush1.xpose.msra.mxu0 %v662
        %1313 = vmatprep.subr.mxu0 %v665
        %1314 = vmatpush1.xpose.msra.mxu0 %v664
        %1315 = vmatprep.subr.mxu0 %v667
        %1316 = vmatpush1.xpose.msra.mxu0 %v666
        %1317 = vmatprep.subr.mxu0 %v669
        %1318 = vmatpush1.xpose.msra.mxu0 %v668
        %1319 = vmatprep.subr.mxu0 %v671
        %1320 = vmatpush1.xpose.msra.mxu0 %v670
        %1321 = vmatprep.subr.mxu0 %v673
        %1322 = vmatpush1.xpose.msra.mxu0 %v672
        %1323 = vmatprep.subr.mxu0 %v675
        %1324 = vmatpush1.xpose.msra.mxu0 %v674
        %1325 = vmatprep.subr.mxu0 %v677
        %1326 = vmatpush1.xpose.msra.mxu0 %v676
        %1327 = vmatprep.subr.mxu0 %v679
        %1328 = vmatpush1.xpose.msra.mxu0 %v678
        %1329 = vmatprep.subr.mxu0 %v681
        %1330 = vmatpush1.xpose.msra.mxu0 %v680
        %1331 = vmatprep.subr.mxu0 %v683
        %1332 = vmatpush1.xpose.msra.mxu0 %v682
        %1333 = vmatprep.subr.mxu0 %v685
        %1334 = vmatpush1.xpose.msra.mxu0 %v684
        %1335 = vmatprep.subr.mxu0 %v687
        %1336 = vmatpush1.xpose.msra.mxu0 %v686
        %1337 = vmatprep.subr.mxu0 %v689
        %1338 = vmatpush1.xpose.msra.mxu0 %v688
        %1339 = vmatprep.mubr.f32.mxu0 %v846
        %1340 = vmatmul.mubr.f32.gmra.mrb[0].mxu0 %v845
        %v1341 = vpop.f32.mrb[0].mxu0
        %v1342 = vadd.f32 %v809, %v1341
        %v1343 = vpop.f32.mrb[0].mxu0
        %v1344 = vadd.f32 %v813, %v1343
        %1345 = vdwg.mxu0
        %1346 = vmatprep.subr.mxu0 %v691
        %1347 = vmatpush1.xpose.msra.mxu0 %v690
        %1348 = vmatprep.subr.mxu0 %v693
        %1349 = vmatpush1.xpose.msra.mxu0 %v692
        %1350 = vmatprep.subr.mxu0 %v695
        %1351 = vmatpush1.xpose.msra.mxu0 %v694
        %1352 = vmatprep.subr.mxu0 %v697
        %1353 = vmatpush1.xpose.msra.mxu0 %v696
        %1354 = vmatprep.subr.mxu0 %v699
        %1355 = vmatpush1.xpose.msra.mxu0 %v698
        %1356 = vmatprep.subr.mxu0 %v701
        %1357 = vmatpush1.xpose.msra.mxu0 %v700
        %1358 = vmatprep.subr.mxu0 %v703
        %1359 = vmatpush1.xpose.msra.mxu0 %v702
        %1360 = vmatprep.subr.mxu0 %v705
        %1361 = vmatpush1.xpose.msra.mxu0 %v704
        %1362 = vmatprep.subr.mxu0 %v707
        %1363 = vmatpush1.xpose.msra.mxu0 %v706
        %1364 = vmatprep.subr.mxu0 %v709
        %1365 = vmatpush1.xpose.msra.mxu0 %v708
        %1366 = vmatprep.subr.mxu0 %v711
        %1367 = vmatpush1.xpose.msra.mxu0 %v710
        %1368 = vmatprep.subr.mxu0 %v713
        %1369 = vmatpush1.xpose.msra.mxu0 %v712
        %1370 = vmatprep.subr.mxu0 %v715
        %1371 = vmatpush1.xpose.msra.mxu0 %v714
        %1372 = vmatprep.subr.mxu0 %v717
        %1373 = vmatpush1.xpose.msra.mxu0 %v716
        %1374 = vmatprep.subr.mxu0 %v719
        %1375 = vmatpush1.xpose.msra.mxu0 %v718
        %1376 = vmatprep.subr.mxu0 %v721
        %1377 = vmatpush1.xpose.msra.mxu0 %v720
        %1378 = vmatprep.subr.mxu0 %v723
        %1379 = vmatpush1.xpose.msra.mxu0 %v722
        %1380 = vmatprep.subr.mxu0 %v725
        %1381 = vmatpush1.xpose.msra.mxu0 %v724
        %1382 = vmatprep.subr.mxu0 %v727
        %1383 = vmatpush1.xpose.msra.mxu0 %v726
        %1384 = vmatprep.subr.mxu0 %v729
        %1385 = vmatpush1.xpose.msra.mxu0 %v728
        %1386 = vmatprep.subr.mxu0 %v731
        %1387 = vmatpush1.xpose.msra.mxu0 %v730
        %1388 = vmatprep.subr.mxu0 %v733
        %1389 = vmatpush1.xpose.msra.mxu0 %v732
        %1390 = vmatprep.subr.mxu0 %v735
        %1391 = vmatpush1.xpose.msra.mxu0 %v734
        %1392 = vmatprep.subr.mxu0 %v737
        %1393 = vmatpush1.xpose.msra.mxu0 %v736
        %1394 = vmatprep.subr.mxu0 %v739
        %1395 = vmatpush1.xpose.msra.mxu0 %v738
        %1396 = vmatprep.subr.mxu0 %v741
        %1397 = vmatpush1.xpose.msra.mxu0 %v740
        %1398 = vmatprep.subr.mxu0 %v743
        %1399 = vmatpush1.xpose.msra.mxu0 %v742
        %1400 = vmatprep.subr.mxu0 %v745
        %1401 = vmatpush1.xpose.msra.mxu0 %v744
        %1402 = vmatprep.subr.mxu0 %v747
        %1403 = vmatpush1.xpose.msra.mxu0 %v746
        %1404 = vmatprep.subr.mxu0 %v749
        %1405 = vmatpush1.xpose.msra.mxu0 %v748
        %1406 = vmatprep.subr.mxu0 %v751
        %1407 = vmatpush1.xpose.msra.mxu0 %v750
        %1408 = vmatprep.subr.mxu0 %v753
        %1409 = vmatpush1.xpose.msra.mxu0 %v752
        %1410 = vmatprep.mubr.f32.mxu0 %v846
        %1411 = vmatmul.mubr.f32.gmra.mrb[0].mxu0 %v845
        %v1412 = vpop.f32.mrb[0].mxu0
        %v1413 = vadd.f32 %v817, %v1412
        %v1414 = vpop.f32.mrb[0].mxu0
        %v1415 = vadd.f32 %v821, %v1414
        %1416 = vdwg.mxu0
        %v1433 = vcombine.low %v916, %v918
        %v1434 = vcombine.low %v987, %v989
        %v1436 = vunpack.c.l.s4 1983009808
        %v1437 = vunpack.c.0.s8 %v1436
        %v1438 = vlaneseq
        %v1439 = vshrl.u32 %v1438, 7
        %v1440 = vsub.s32 %v1437, %v1439
        %v1441 = vrot.slane %v1433, %v1440
        %v1443 = vunpack.c.l.s4 1983009808
        %v1444 = vunpack.c.0.s8 %v1443
        %v1445 = vlaneseq
        %v1446 = vshrl.u32 %v1445, 7
        %v1447 = vsub.s32 %v1444, %v1446
        %v1448 = vrot.slane %v1434, %v1447
        %v1449 = vcombine.low %v1441, %v1448
        %v1450 = vcombine.low %v1058, %v1060
        %v1451 = vcombine.low %v1129, %v1131
        %v1453 = vunpack.c.l.s4 1983009808
        %v1454 = vunpack.c.0.s8 %v1453
        %v1455 = vlaneseq
        %v1456 = vshrl.u32 %v1455, 7
        %v1457 = vsub.s32 %v1454, %v1456
        %v1458 = vrot.slane %v1450, %v1457
        %v1460 = vunpack.c.l.s4 1983009808
        %v1461 = vunpack.c.0.s8 %v1460
        %v1462 = vlaneseq
        %v1463 = vshrl.u32 %v1462, 7
        %v1464 = vsub.s32 %v1461, %v1463
        %v1465 = vrot.slane %v1451, %v1464
        %v1466 = vcombine.low %v1458, %v1465
        %v1467 = vcombine.low %v1200, %v1202
        %v1468 = vcombine.low %v1271, %v1273
        %v1470 = vunpack.c.l.s4 1983009808
        %v1471 = vunpack.c.0.s8 %v1470
        %v1472 = vlaneseq
        %v1473 = vshrl.u32 %v1472, 7
        %v1474 = vsub.s32 %v1471, %v1473
        %v1475 = vrot.slane %v1467, %v1474
        %v1477 = vunpack.c.l.s4 1983009808
        %v1478 = vunpack.c.0.s8 %v1477
        %v1479 = vlaneseq
        %v1480 = vshrl.u32 %v1479, 7
        %v1481 = vsub.s32 %v1478, %v1480
        %v1482 = vrot.slane %v1468, %v1481
        %v1483 = vcombine.low %v1475, %v1482
        %v1484 = vcombine.low %v1342, %v1344
        %v1485 = vcombine.low %v1413, %v1415
        %v1487 = vunpack.c.l.s4 1983009808
        %v1488 = vunpack.c.0.s8 %v1487
        %v1489 = vlaneseq
        %v1490 = vshrl.u32 %v1489, 7
        %v1491 = vsub.s32 %v1488, %v1490
        %v1492 = vrot.slane %v1484, %v1491
        %v1494 = vunpack.c.l.s4 1983009808
        %v1495 = vunpack.c.0.s8 %v1494
        %v1496 = vlaneseq
        %v1497 = vshrl.u32 %v1496, 7
        %v1498 = vsub.s32 %v1495, %v1497
        %v1499 = vrot.slane %v1485, %v1498
        %v1500 = vcombine.low %v1492, %v1499
        %1505 = vst [vmem:[%s237] sm:$0xff] %v1449
        %1506 = vst [vmem:[%s237 + $0x8] sm:$0xff] %v1466
        %1507 = vst [vmem:[%s237 + $0x10] sm:$0xff] %v1483
        %1508 = vst [vmem:[%s237 + $0x18] sm:$0xff] %v1500
        %s1509 = sand.u32 %s102, 1
        %s1510 = scalar_lea.sflag [#allocation4], %s1509
        %s1511 = sand.u32 %s102, 1
        %s1512 = smul.addr %s1511, 32
        %s1513 = scalar_lea.vmem [#allocation8], %s1512
        // Predicated region
        $region45: #{tpu_custom_call.1} parent=31 // pred_check
          %p1514 = pneg %p112
        $region46: #{tpu_custom_call.1} parent=31 // pred_check_branch
          %1516 = sbr.rel (%p1514) target = $region48
        $region47: #{tpu_custom_call.1} parent=31 // pred_region
          %s1517 = smul.u32 16, %s21
          %s1519 = ssub.s32 512, 512
          %1520 = vsyncadd %s1510, %s1519
          %s1521 = smul.addr %s1517, 32
          %s1522 = scalar_lea.hbm %s3, %s1521
          %s1524 = sshll.u32 %s1513, 4
          %s1525 = int_to_ptr.vmem [resolvable:$true] %s1524
          %1527 = dma.vmem_to_hbm [thread:$0]  %s1525, 512, %s1522, %s1510
        $region48: #{tpu_custom_call.1} parent=31 // pred_fallthru
          _
      $region32: #{tpu_custom_call.1} parent=5 // pred_fallthru
        _
      %p1528 = scmp.le.s32.totalorder 2, %s16
      // Predicated region
      $region49: #{tpu_custom_call.1} parent=5 // pred_check
        %p1529 = pneg %p1528
      $region50: #{tpu_custom_call.1} parent=5 // pred_check_branch
        %1531 = sbr.rel (%p1529) target = $region52
      $region51: #{tpu_custom_call.1} parent=5 // pred_region
        %s1532 = ssub.s32 %s16, 2
        // Predicated region
        $region53: #{tpu_custom_call.1} parent=51 // pred_check
          %p1533 = pneg %p118
        $region54: #{tpu_custom_call.1} parent=51 // pred_check_branch
          %1535 = sbr.rel (%p1533) target = $region56
        $region55: #{tpu_custom_call.1} parent=51 // pred_region
          %s1536 = sand.u32 %s103, 1
          %s1537 = scalar_lea.sflag [#allocation4], %s1536
          %s1538 = sand.u32 %s103, 1
          %s1539 = smul.addr %s1538, 32
          %s1540 = scalar_lea.vmem [#allocation8], %s1539
          %1541 = dma.done %s1537, 512
        $region56: #{tpu_custom_call.1} parent=51 // pred_fallthru
          _
      $region52: #{tpu_custom_call.1} parent=5 // pred_fallthru
        _
    $region6: #{tpu_custom_call.1} parent=1 // loop_footer
      %s20 = sadd.s32 1, %s16
    $region7: #{tpu_custom_call.1} parent=1 // loop_footer_branch
      %15 = sbr.rel target = $region3
    $region8: #{tpu_custom_call.1} parent=1 // loop_exit
      _
    %1542 = vsyncpa [#allocation3], 1
    %s1543 = scalar_lea.sflag [#allocation3], 1
    %1544 = vsyncpa %s1543, 1
    %1545 = vsyncpa [#allocation6], 1
    %s1546 = scalar_lea.sflag [#allocation6], 1
    %1547 = vsyncpa %s1546, 1
    %1548 = vsyncpa [#allocation4], 1
    %s1549 = scalar_lea.sflag [#allocation4], 1
    %1550 = vsyncpa %s1549, 1

</llo_original>
